<compile_context>
chip_gen: v7x
topology: tpu7x:2x2x1
jax: 0.10.0
libtpu: 0.0.40
codegen_flags: <defaults>
</compile_context>

<pallas_src>
import functools

import jax
import jax.numpy as jnp
from jax.experimental import pallas as pl
from jax.experimental.pallas import tpu as pltpu


def _gru_fused_kernel(x_ref, wih_ref, whh_ref, gb_ref, bhn_ref, wfc_ref, bfc_ref,
                      out_ref, hid_ref, *, seq_len, rows, gate_pad):
    """Single-invocation fused GRU-over-sequence + FC (no scratch, no masked stores).

    Shapes (time-major; each timestep owns a sublane-aligned block of `rows`):
      x_ref   : (T*R, I)    bf16   time-major inputs, rows padded to R per step
      wih_ref : (I,  3*GP)  bf16   gate-padded W_ih^T (r,z,n blocks of GP lanes)
      whh_ref : (GP, 3*GP)  bf16   gate-padded W_hh^T (rows >= H are zero)
      gb_ref  : (1,  3*GP)  f32    folded biases: [b_ir+b_hr | b_iz+b_hz | b_in]
      bhn_ref : (1,  GP)    f32    b_hn (multiplied by r, cannot be folded)
      wfc_ref : (GP, OP)    bf16   W_fc^T padded to a 128-lane output slab
      bfc_ref : (1,  OP)    f32
      out_ref : (T*R, OP)   f32    lane-dense FC output slab
      hid_ref : (T*R, GP)   f32    lane-dense hidden-state slab
    """
    T, R, GP = seq_len, rows, gate_pad
    f32 = jnp.float32
    bf16 = jnp.bfloat16

    # ---- hoisted input projection for ALL timesteps: one MXU matmul ------------
    # bf16 operands, f32 accumulation; result stays register/value-resident.
    gi = (jnp.dot(x_ref[...], wih_ref[...], preferred_element_type=f32)
          + gb_ref[...])                                  # (T*R, 3*GP) f32

    # Hoist the b_hn broadcast out of the unrolled recurrence (no CSE of
    # broadcast_in_dim otherwise).
    bhn = jnp.broadcast_to(bhn_ref[...], (R, GP))         # (R, GP) f32

    # ---- serial recurrence over time (the only latency-bound part) -------------
    # Fully-unrolled static loop: h and the per-step hidden states are carried as
    # values (vregs); no per-step VMEM store/reload on the serial critical path.
    h = jnp.zeros((R, GP), f32)
    hs = []
    for t in range(T):
        gi_t = gi[t * R:(t + 1) * R, :]                   # full-tile aligned slice
        whh = whh_ref[...]                                # in-loop load: short live range
        gh = jnp.dot(h.astype(bf16), whh,
                     preferred_element_type=f32)          # (R, 3*GP) f32 acc
        r = jax.nn.sigmoid(gi_t[:, 0:GP] + gh[:, 0:GP])
        z = jax.nn.sigmoid(gi_t[:, GP:2 * GP] + gh[:, GP:2 * GP])
        n = jnp.tanh(gi_t[:, 2 * GP:] + r * (gh[:, 2 * GP:] + bhn))
        h = n + z * (h - n)                               # == (1-z)*n + z*h
        hs.append(h)

    # ---- bulk, lane-dense stores + hoisted FC over all hidden states -----------
    h_all = jnp.concatenate(hs, axis=0)                   # (T*R, GP), tile-aligned stack
    hid_ref[...] = h_all                                  # unmasked 128-wide stores
    out_ref[...] = (jnp.dot(h_all.astype(bf16), wfc_ref[...],
                            preferred_element_type=f32) + bfc_ref[...])


def working_memory_net_forward(inputs, params):
    """inputs: (batch, seq_len, input_size) float32, PyTorch layout.
    Returns (outputs, hiddens) with shapes (B, T, O) and (B, T, H)."""
    inputs = inputs.astype(jnp.float32)
    B, T, I = inputs.shape
    w_ih, w_hh = params["w_ih"], params["w_hh"]      # (I, 3H), (H, 3H)
    b_ih, b_hh = params["b_ih"], params["b_hh"]      # (3H,),   (3H,)
    w_fc, b_fc = params["w_fc"], params["b_fc"]      # (H, O),  (O,)
    H = w_hh.shape[0]
    O = w_fc.shape[1]
    GP = ((H + 127) // 128) * 128                    # per-gate lane-aligned block
    OP = ((O + 127) // 128) * 128                    # lane-dense output slab width
    ROWS = ((B + 7) // 8) * 8                        # sublane-aligned rows per timestep

    # Gate-padded, lane-aligned, bias-folded parameter layout.
    # (Tiny one-time XLA work; at production sizes pack once and cache.)
    wih_p = jnp.zeros((I, 3 * GP), jnp.float32)
    whh_p = jnp.zeros((GP, 3 * GP), jnp.float32)
    for g in range(3):
        wih_p = wih_p.at[:, g * GP:g * GP + H].set(w_ih[:, g * H:(g + 1) * H])
        whh_p = whh_p.at[:H, g * GP:g * GP + H].set(w_hh[:, g * H:(g + 1) * H])
    gb = jnp.zeros((1, 3 * GP), jnp.float32)
    gb = gb.at[0, 0 * GP:0 * GP + H].set(b_ih[0:H] + b_hh[0:H])            # r
    gb = gb.at[0, 1 * GP:1 * GP + H].set(b_ih[H:2 * H] + b_hh[H:2 * H])    # z
    gb = gb.at[0, 2 * GP:2 * GP + H].set(b_ih[2 * H:3 * H])                # n (input bias only)
    bhn_p = jnp.zeros((1, GP), jnp.float32).at[0, :H].set(b_hh[2 * H:3 * H])
    wfc_p = jnp.zeros((GP, OP), jnp.float32).at[:H, :O].set(w_fc)
    bfc_p = jnp.zeros((1, OP), jnp.float32).at[0, :O].set(b_fc)

    # bf16 MXU operands (f32 accumulation happens inside the kernel dots).
    wih_b = wih_p.astype(jnp.bfloat16)
    whh_b = whh_p.astype(jnp.bfloat16)
    wfc_b = wfc_p.astype(jnp.bfloat16)

    # Time-major input, batch rows padded to a full sublane tile per timestep.
    # (Noise-sized reshuffle here; fold into the producer at production sizes.)
    x_tm = jnp.transpose(inputs, (1, 0, 2))                       # (T, B, I)
    x_pad = jnp.zeros((T, ROWS, I), jnp.float32).at[:, :B, :].set(x_tm)
    x2 = x_pad.reshape(T * ROWS, I).astype(jnp.bfloat16)

    kernel = functools.partial(_gru_fused_kernel,
                               seq_len=T, rows=ROWS, gate_pad=GP)

    out2d, hid2d = pl.pallas_call(
        kernel,
        out_shape=(
            jax.ShapeDtypeStruct((T * ROWS, OP), jnp.float32),
            jax.ShapeDtypeStruct((T * ROWS, GP), jnp.float32),
        ),
        grid_spec=pltpu.PrefetchScalarGridSpec(
            num_scalar_prefetch=0,
            grid=(1,),                                            # single invocation
            in_specs=[
                pl.BlockSpec((T * ROWS, I), lambda i: (0, 0)),    # x (time-major, row-padded)
                pl.BlockSpec((I, 3 * GP), lambda i: (0, 0)),      # W_ih^T (gate-padded, bf16)
                pl.BlockSpec((GP, 3 * GP), lambda i: (0, 0)),     # W_hh^T (gate-padded, bf16)
                pl.BlockSpec((1, 3 * GP), lambda i: (0, 0)),      # folded gate biases
                pl.BlockSpec((1, GP), lambda i: (0, 0)),          # b_hn
                pl.BlockSpec((GP, OP), lambda i: (0, 0)),         # W_fc^T (lane-padded, bf16)
                pl.BlockSpec((1, OP), lambda i: (0, 0)),          # b_fc (lane-padded)
            ],
            out_specs=[
                pl.BlockSpec((T * ROWS, OP), lambda i: (0, 0)),   # lane-dense output slab
                pl.BlockSpec((T * ROWS, GP), lambda i: (0, 0)),   # lane-dense hidden slab
            ],
        ),
        compiler_params=pltpu.CompilerParams(
            dimension_semantics=("arbitrary",)),
    )(x2, wih_b, whh_b, gb, bhn_p, wfc_b, bfc_p)

    # Un-pad in the XLA wrapper (lane/sublane slicing stays out of the kernel).
    outputs = out2d.reshape(T, ROWS, OP)[:, :B, :O].transpose(1, 0, 2)   # (B, T, O)
    hiddens = hid2d.reshape(T, ROWS, GP)[:, :B, :H].transpose(1, 0, 2)   # (B, T, H)
    return outputs, hiddens


def init_params(key, input_size, output_size, hidden_size):
    """Deterministic init mimicking PyTorch's uniform(-1/sqrt(H), 1/sqrt(H)).
    Weights are stored pre-transposed: (in_features, out_features), gate order r,z,n."""
    k = 1.0 / jnp.sqrt(jnp.float32(hidden_size))
    keys = jax.random.split(key, 6)
    u = lambda kk, shape: jax.random.uniform(kk, shape, jnp.float32, -k, k)
    return {
        "w_ih": u(keys[0], (input_size, 3 * hidden_size)),   # GRUCell weight_ih^T
        "w_hh": u(keys[1], (hidden_size, 3 * hidden_size)),  # GRUCell weight_hh^T
        "b_ih": u(keys[2], (3 * hidden_size,)),
        "b_hh": u(keys[3], (3 * hidden_size,)),
        "w_fc": u(keys[4], (hidden_size, output_size)),      # Linear weight^T
        "b_fc": u(keys[5], (output_size,)),
    }


def _reference_forward(inputs, params):
    """Pure-JAX f32 reference (same math as torch GRUCell + Linear)."""
    B, T, I = inputs.shape
    H = params["w_hh"].shape[0]
    h = jnp.zeros((B, H), jnp.float32)
    outs, hids = [], []
    for t in range(T):
        x = inputs[:, t, :]
        gi = x @ params["w_ih"] + params["b_ih"]
        gh = h @ params["w_hh"] + params["b_hh"]
        i_r, i_z, i_n = jnp.split(gi, 3, axis=1)
        h_r, h_z, h_n = jnp.split(gh, 3, axis=1)
        r = jax.nn.sigmoid(i_r + h_r)
        z = jax.nn.sigmoid(i_z + h_z)
        n = jnp.tanh(i_n + r * h_n)
        h = (1.0 - z) * n + z * h
        outs.append(h @ params["w_fc"] + params["b_fc"])
        hids.append(h)
    return jnp.stack(outs, axis=1), jnp.stack(hids, axis=1)


def _reference_forward_mixed(inputs, params):
    """Pure-JAX reference with the same mixed-precision policy as the kernel:
    bf16 matmul operands, f32 accumulation, f32 gate math and f32 h carry."""
    B, T, I = inputs.shape
    H = params["w_hh"].shape[0]
    bf16, f32 = jnp.bfloat16, jnp.float32
    w_ih = params["w_ih"].astype(bf16)
    w_hh = params["w_hh"].astype(bf16)
    w_fc = params["w_fc"].astype(bf16)
    b_ih, b_hh, b_fc = params["b_ih"], params["b_hh"], params["b_fc"]
    h = jnp.zeros((B, H), f32)
    outs, hids = [], []
    for t in range(T):
        x = inputs[:, t, :].astype(bf16)
        gi = jnp.dot(x, w_ih, preferred_element_type=f32) + b_ih
        gh = jnp.dot(h.astype(bf16), w_hh, preferred_element_type=f32) + b_hh
        i_r, i_z, i_n = jnp.split(gi, 3, axis=1)
        h_r, h_z, h_n = jnp.split(gh, 3, axis=1)
        r = jax.nn.sigmoid(i_r + h_r)
        z = jax.nn.sigmoid(i_z + h_z)
        n = jnp.tanh(i_n + r * h_n)
        h = n + z * (h - n)
        outs.append(jnp.dot(h.astype(bf16), w_fc, preferred_element_type=f32) + b_fc)
        hids.append(h)
    return jnp.stack(outs, axis=1), jnp.stack(hids, axis=1)


if __name__ == "__main__":
    batch_size, seq_len, input_size = 2, 8, 4
    hidden_size, output_size = 32, 4

    key = jax.random.PRNGKey(0)
    k_x, k_p = jax.random.split(key)
    inputs = jax.random.normal(k_x, (batch_size, seq_len, input_size), jnp.float32)
    params = init_params(k_p, input_size, output_size, hidden_size)

    outputs, hiddens = jax.jit(working_memory_net_forward)(inputs, params)
    jax.block_until_ready((outputs, hiddens))

    assert outputs.shape == (batch_size, seq_len, output_size)
    assert hiddens.shape == (batch_size, seq_len, hidden_size)

    # Tight check: kernel math vs a reference with the identical bf16-operand /
    # f32-accumulate matmul policy (differences are reduction-order only).
    mx_out, mx_hid = _reference_forward_mixed(inputs, params)
    assert jnp.allclose(outputs, mx_out, atol=2e-3), "outputs mismatch (mixed ref)"
    assert jnp.allclose(hiddens, mx_hid, atol=2e-3), "hiddens mismatch (mixed ref)"

    # Loose check: bounds the bf16-operand drift vs the exact f32 reference.
    f32_out, f32_hid = _reference_forward(inputs, params)
    assert jnp.allclose(outputs, f32_out, atol=5e-2), "outputs drift vs f32 ref"
    assert jnp.allclose(hiddens, f32_hid, atol=5e-2), "hiddens drift vs f32 ref"

    print("KERNEL_OK")
</pallas_src>

<mosaic_0001>
module attributes {stable_mosaic.version = 11 : i64} {
  func.func @_gru_fused_kernel(%arg0: i32, %arg1: memref<64x4xbf16, #tpu.memory_space<vmem>>, %arg2: memref<4x384xbf16, #tpu.memory_space<vmem>>, %arg3: memref<128x384xbf16, #tpu.memory_space<vmem>>, %arg4: memref<1x384xf32, #tpu.memory_space<vmem>>, %arg5: memref<1x128xf32, #tpu.memory_space<vmem>>, %arg6: memref<128x128xbf16, #tpu.memory_space<vmem>>, %arg7: memref<1x128xf32, #tpu.memory_space<vmem>>, %arg8: memref<64x128xf32, #tpu.memory_space<vmem>>, %arg9: memref<64x128xf32, #tpu.memory_space<vmem>>) attributes {dimension_semantics = [#tpu.dimension_semantics<arbitrary>], iteration_bounds = array<i64: 1>, scalar_prefetch = 0 : i64, scratch_operands = 0 : i64, tpu.core_type = #tpu.core_type<tc>, window_params = [{pipeline_mode = #tpu.pipeline_mode<synchronous>, transform_indices = @transform_0, window_bounds = array<i64: 64, 4>}, {pipeline_mode = #tpu.pipeline_mode<synchronous>, transform_indices = @transform_1, window_bounds = array<i64: 4, 384>}, {pipeline_mode = #tpu.pipeline_mode<synchronous>, transform_indices = @transform_2, window_bounds = array<i64: 128, 384>}, {pipeline_mode = #tpu.pipeline_mode<synchronous>, transform_indices = @transform_3, window_bounds = array<i64: 1, 384>}, {pipeline_mode = #tpu.pipeline_mode<synchronous>, transform_indices = @transform_4, window_bounds = array<i64: 1, 128>}, {pipeline_mode = #tpu.pipeline_mode<synchronous>, transform_indices = @transform_5, window_bounds = array<i64: 128, 128>}, {pipeline_mode = #tpu.pipeline_mode<synchronous>, transform_indices = @transform_6, window_bounds = array<i64: 1, 128>}, {pipeline_mode = #tpu.pipeline_mode<synchronous>, transform_indices = @transform_7, window_bounds = array<i64: 64, 128>}, {pipeline_mode = #tpu.pipeline_mode<synchronous>, transform_indices = @transform_8, window_bounds = array<i64: 64, 128>}]} {
    %c0 = arith.constant 0 : index
    %c0_0 = arith.constant 0 : index
    %0 = vector.load %arg1[%c0, %c0_0] : memref<64x4xbf16, #tpu.memory_space<vmem>>, vector<64x4xbf16>
    %c0_1 = arith.constant 0 : index
    %c0_2 = arith.constant 0 : index
    %1 = vector.load %arg2[%c0_1, %c0_2] : memref<4x384xbf16, #tpu.memory_space<vmem>>, vector<4x384xbf16>
    %cst = arith.constant dense<0.000000e+00> : vector<64x384xf32>
    %2 = tpu.matmul %0, %1, %cst {dimension_numbers = #tpu.dot_dimension_numbers<[1], [0], [0], [1], [0, 0, 1, 1], [], []>} : vector<64x4xbf16>, vector<4x384xbf16>, vector<64x384xf32> -> vector<64x384xf32>
    %c0_3 = arith.constant 0 : index
    %c0_4 = arith.constant 0 : index
    %3 = vector.load %arg4[%c0_3, %c0_4] : memref<1x384xf32, #tpu.memory_space<vmem>>, vector<1x384xf32>
    %4 = vector.broadcast %3 : vector<1x384xf32> to vector<64x384xf32>
    %5 = arith.addf %2, %4 : vector<64x384xf32>
    %c0_5 = arith.constant 0 : index
    %c0_6 = arith.constant 0 : index
    %6 = vector.load %arg5[%c0_5, %c0_6] : memref<1x128xf32, #tpu.memory_space<vmem>>, vector<1x128xf32>
    %7 = vector.shape_cast %6 : vector<1x128xf32> to vector<1x128xf32>
    %8 = vector.broadcast %7 : vector<1x128xf32> to vector<8x128xf32>
    %cst_7 = arith.constant 0.000000e+00 : f32
    %9 = vector.broadcast %cst_7 : f32 to vector<8x128xf32>
    %10 = vector.extract_strided_slice %5 {offsets = [0, 0], sizes = [8, 384], strides = [1, 1]} : vector<64x384xf32> to vector<8x384xf32>
    %c0_8 = arith.constant 0 : index
    %c0_9 = arith.constant 0 : index
    %11 = vector.load %arg3[%c0_8, %c0_9] : memref<128x384xbf16, #tpu.memory_space<vmem>>, vector<128x384xbf16>
    %12 = arith.truncf %9 : vector<8x128xf32> to vector<8x128xbf16>
    %cst_10 = arith.constant dense<0.000000e+00> : vector<8x384xf32>
    %13 = tpu.matmul %12, %11, %cst_10 {dimension_numbers = #tpu.dot_dimension_numbers<[1], [0], [0], [1], [0, 0, 1, 1], [], []>} : vector<8x128xbf16>, vector<128x384xbf16>, vector<8x384xf32> -> vector<8x384xf32>
    %14 = vector.extract_strided_slice %10 {offsets = [0, 0], sizes = [8, 128], strides = [1, 1]} : vector<8x384xf32> to vector<8x128xf32>
    %15 = vector.extract_strided_slice %13 {offsets = [0, 0], sizes = [8, 128], strides = [1, 1]} : vector<8x384xf32> to vector<8x128xf32>
    %16 = arith.addf %14, %15 : vector<8x128xf32>
    %17 = arith.negf %16 : vector<8x128xf32>
    %18 = math.exp %17 : vector<8x128xf32>
    %cst_11 = arith.constant 1.000000e+00 : f32
    %19 = vector.broadcast %cst_11 : f32 to vector<8x128xf32>
    %20 = arith.addf %19, %18 : vector<8x128xf32>
    %21 = arith.divf %19, %20 : vector<8x128xf32>
    %22 = vector.extract_strided_slice %10 {offsets = [0, 128], sizes = [8, 128], strides = [1, 1]} : vector<8x384xf32> to vector<8x128xf32>
    %23 = vector.extract_strided_slice %13 {offsets = [0, 128], sizes = [8, 128], strides = [1, 1]} : vector<8x384xf32> to vector<8x128xf32>
    %24 = arith.addf %22, %23 : vector<8x128xf32>
    %25 = arith.negf %24 : vector<8x128xf32>
    %26 = math.exp %25 : vector<8x128xf32>
    %cst_12 = arith.constant 1.000000e+00 : f32
    %27 = vector.broadcast %cst_12 : f32 to vector<8x128xf32>
    %28 = arith.addf %27, %26 : vector<8x128xf32>
    %29 = arith.divf %27, %28 : vector<8x128xf32>
    %30 = vector.extract_strided_slice %10 {offsets = [0, 256], sizes = [8, 128], strides = [1, 1]} : vector<8x384xf32> to vector<8x128xf32>
    %31 = vector.extract_strided_slice %13 {offsets = [0, 256], sizes = [8, 128], strides = [1, 1]} : vector<8x384xf32> to vector<8x128xf32>
    %32 = arith.addf %31, %8 : vector<8x128xf32>
    %33 = arith.mulf %21, %32 : vector<8x128xf32>
    %34 = arith.addf %30, %33 : vector<8x128xf32>
    %35 = math.tanh %34 : vector<8x128xf32>
    %36 = arith.subf %9, %35 : vector<8x128xf32>
    %37 = arith.mulf %29, %36 : vector<8x128xf32>
    %38 = arith.addf %35, %37 : vector<8x128xf32>
    %39 = vector.extract_strided_slice %5 {offsets = [8, 0], sizes = [8, 384], strides = [1, 1]} : vector<64x384xf32> to vector<8x384xf32>
    %c0_13 = arith.constant 0 : index
    %c0_14 = arith.constant 0 : index
    %40 = vector.load %arg3[%c0_13, %c0_14] : memref<128x384xbf16, #tpu.memory_space<vmem>>, vector<128x384xbf16>
    %41 = arith.truncf %38 : vector<8x128xf32> to vector<8x128xbf16>
    %cst_15 = arith.constant dense<0.000000e+00> : vector<8x384xf32>
    %42 = tpu.matmul %41, %40, %cst_15 {dimension_numbers = #tpu.dot_dimension_numbers<[1], [0], [0], [1], [0, 0, 1, 1], [], []>} : vector<8x128xbf16>, vector<128x384xbf16>, vector<8x384xf32> -> vector<8x384xf32>
    %43 = vector.extract_strided_slice %39 {offsets = [0, 0], sizes = [8, 128], strides = [1, 1]} : vector<8x384xf32> to vector<8x128xf32>
    %44 = vector.extract_strided_slice %42 {offsets = [0, 0], sizes = [8, 128], strides = [1, 1]} : vector<8x384xf32> to vector<8x128xf32>
    %45 = arith.addf %43, %44 : vector<8x128xf32>
    %46 = arith.negf %45 : vector<8x128xf32>
    %47 = math.exp %46 : vector<8x128xf32>
    %cst_16 = arith.constant 1.000000e+00 : f32
    %48 = vector.broadcast %cst_16 : f32 to vector<8x128xf32>
    %49 = arith.addf %48, %47 : vector<8x128xf32>
    %50 = arith.divf %48, %49 : vector<8x128xf32>
    %51 = vector.extract_strided_slice %39 {offsets = [0, 128], sizes = [8, 128], strides = [1, 1]} : vector<8x384xf32> to vector<8x128xf32>
    %52 = vector.extract_strided_slice %42 {offsets = [0, 128], sizes = [8, 128], strides = [1, 1]} : vector<8x384xf32> to vector<8x128xf32>
    %53 = arith.addf %51, %52 : vector<8x128xf32>
    %54 = arith.negf %53 : vector<8x128xf32>
    %55 = math.exp %54 : vector<8x128xf32>
    %cst_17 = arith.constant 1.000000e+00 : f32
    %56 = vector.broadcast %cst_17 : f32 to vector<8x128xf32>
    %57 = arith.addf %56, %55 : vector<8x128xf32>
    %58 = arith.divf %56, %57 : vector<8x128xf32>
    %59 = vector.extract_strided_slice %39 {offsets = [0, 256], sizes = [8, 128], strides = [1, 1]} : vector<8x384xf32> to vector<8x128xf32>
    %60 = vector.extract_strided_slice %42 {offsets = [0, 256], sizes = [8, 128], strides = [1, 1]} : vector<8x384xf32> to vector<8x128xf32>
    %61 = arith.addf %60, %8 : vector<8x128xf32>
    %62 = arith.mulf %50, %61 : vector<8x128xf32>
    %63 = arith.addf %59, %62 : vector<8x128xf32>
    %64 = math.tanh %63 : vector<8x128xf32>
    %65 = arith.subf %38, %64 : vector<8x128xf32>
    %66 = arith.mulf %58, %65 : vector<8x128xf32>
    %67 = arith.addf %64, %66 : vector<8x128xf32>
    %68 = vector.extract_strided_slice %5 {offsets = [16, 0], sizes = [8, 384], strides = [1, 1]} : vector<64x384xf32> to vector<8x384xf32>
    %c0_18 = arith.constant 0 : index
    %c0_19 = arith.constant 0 : index
    %69 = vector.load %arg3[%c0_18, %c0_19] : memref<128x384xbf16, #tpu.memory_space<vmem>>, vector<128x384xbf16>
    %70 = arith.truncf %67 : vector<8x128xf32> to vector<8x128xbf16>
    %cst_20 = arith.constant dense<0.000000e+00> : vector<8x384xf32>
    %71 = tpu.matmul %70, %69, %cst_20 {dimension_numbers = #tpu.dot_dimension_numbers<[1], [0], [0], [1], [0, 0, 1, 1], [], []>} : vector<8x128xbf16>, vector<128x384xbf16>, vector<8x384xf32> -> vector<8x384xf32>
    %72 = vector.extract_strided_slice %68 {offsets = [0, 0], sizes = [8, 128], strides = [1, 1]} : vector<8x384xf32> to vector<8x128xf32>
    %73 = vector.extract_strided_slice %71 {offsets = [0, 0], sizes = [8, 128], strides = [1, 1]} : vector<8x384xf32> to vector<8x128xf32>
    %74 = arith.addf %72, %73 : vector<8x128xf32>
    %75 = arith.negf %74 : vector<8x128xf32>
    %76 = math.exp %75 : vector<8x128xf32>
    %cst_21 = arith.constant 1.000000e+00 : f32
    %77 = vector.broadcast %cst_21 : f32 to vector<8x128xf32>
    %78 = arith.addf %77, %76 : vector<8x128xf32>
    %79 = arith.divf %77, %78 : vector<8x128xf32>
    %80 = vector.extract_strided_slice %68 {offsets = [0, 128], sizes = [8, 128], strides = [1, 1]} : vector<8x384xf32> to vector<8x128xf32>
    %81 = vector.extract_strided_slice %71 {offsets = [0, 128], sizes = [8, 128], strides = [1, 1]} : vector<8x384xf32> to vector<8x128xf32>
    %82 = arith.addf %80, %81 : vector<8x128xf32>
    %83 = arith.negf %82 : vector<8x128xf32>
    %84 = math.exp %83 : vector<8x128xf32>
    %cst_22 = arith.constant 1.000000e+00 : f32
    %85 = vector.broadcast %cst_22 : f32 to vector<8x128xf32>
    %86 = arith.addf %85, %84 : vector<8x128xf32>
    %87 = arith.divf %85, %86 : vector<8x128xf32>
    %88 = vector.extract_strided_slice %68 {offsets = [0, 256], sizes = [8, 128], strides = [1, 1]} : vector<8x384xf32> to vector<8x128xf32>
    %89 = vector.extract_strided_slice %71 {offsets = [0, 256], sizes = [8, 128], strides = [1, 1]} : vector<8x384xf32> to vector<8x128xf32>
    %90 = arith.addf %89, %8 : vector<8x128xf32>
    %91 = arith.mulf %79, %90 : vector<8x128xf32>
    %92 = arith.addf %88, %91 : vector<8x128xf32>
    %93 = math.tanh %92 : vector<8x128xf32>
    %94 = arith.subf %67, %93 : vector<8x128xf32>
    %95 = arith.mulf %87, %94 : vector<8x128xf32>
    %96 = arith.addf %93, %95 : vector<8x128xf32>
    %97 = vector.extract_strided_slice %5 {offsets = [24, 0], sizes = [8, 384], strides = [1, 1]} : vector<64x384xf32> to vector<8x384xf32>
    %c0_23 = arith.constant 0 : index
    %c0_24 = arith.constant 0 : index
    %98 = vector.load %arg3[%c0_23, %c0_24] : memref<128x384xbf16, #tpu.memory_space<vmem>>, vector<128x384xbf16>
    %99 = arith.truncf %96 : vector<8x128xf32> to vector<8x128xbf16>
    %cst_25 = arith.constant dense<0.000000e+00> : vector<8x384xf32>
    %100 = tpu.matmul %99, %98, %cst_25 {dimension_numbers = #tpu.dot_dimension_numbers<[1], [0], [0], [1], [0, 0, 1, 1], [], []>} : vector<8x128xbf16>, vector<128x384xbf16>, vector<8x384xf32> -> vector<8x384xf32>
    %101 = vector.extract_strided_slice %97 {offsets = [0, 0], sizes = [8, 128], strides = [1, 1]} : vector<8x384xf32> to vector<8x128xf32>
    %102 = vector.extract_strided_slice %100 {offsets = [0, 0], sizes = [8, 128], strides = [1, 1]} : vector<8x384xf32> to vector<8x128xf32>
    %103 = arith.addf %101, %102 : vector<8x128xf32>
    %104 = arith.negf %103 : vector<8x128xf32>
    %105 = math.exp %104 : vector<8x128xf32>
    %cst_26 = arith.constant 1.000000e+00 : f32
    %106 = vector.broadcast %cst_26 : f32 to vector<8x128xf32>
    %107 = arith.addf %106, %105 : vector<8x128xf32>
    %108 = arith.divf %106, %107 : vector<8x128xf32>
    %109 = vector.extract_strided_slice %97 {offsets = [0, 128], sizes = [8, 128], strides = [1, 1]} : vector<8x384xf32> to vector<8x128xf32>
    %110 = vector.extract_strided_slice %100 {offsets = [0, 128], sizes = [8, 128], strides = [1, 1]} : vector<8x384xf32> to vector<8x128xf32>
    %111 = arith.addf %109, %110 : vector<8x128xf32>
    %112 = arith.negf %111 : vector<8x128xf32>
    %113 = math.exp %112 : vector<8x128xf32>
    %cst_27 = arith.constant 1.000000e+00 : f32
    %114 = vector.broadcast %cst_27 : f32 to vector<8x128xf32>
    %115 = arith.addf %114, %113 : vector<8x128xf32>
    %116 = arith.divf %114, %115 : vector<8x128xf32>
    %117 = vector.extract_strided_slice %97 {offsets = [0, 256], sizes = [8, 128], strides = [1, 1]} : vector<8x384xf32> to vector<8x128xf32>
    %118 = vector.extract_strided_slice %100 {offsets = [0, 256], sizes = [8, 128], strides = [1, 1]} : vector<8x384xf32> to vector<8x128xf32>
    %119 = arith.addf %118, %8 : vector<8x128xf32>
    %120 = arith.mulf %108, %119 : vector<8x128xf32>
    %121 = arith.addf %117, %120 : vector<8x128xf32>
    %122 = math.tanh %121 : vector<8x128xf32>
    %123 = arith.subf %96, %122 : vector<8x128xf32>
    %124 = arith.mulf %116, %123 : vector<8x128xf32>
    %125 = arith.addf %122, %124 : vector<8x128xf32>
    %126 = vector.extract_strided_slice %5 {offsets = [32, 0], sizes = [8, 384], strides = [1, 1]} : vector<64x384xf32> to vector<8x384xf32>
    %c0_28 = arith.constant 0 : index
    %c0_29 = arith.constant 0 : index
    %127 = vector.load %arg3[%c0_28, %c0_29] : memref<128x384xbf16, #tpu.memory_space<vmem>>, vector<128x384xbf16>
    %128 = arith.truncf %125 : vector<8x128xf32> to vector<8x128xbf16>
    %cst_30 = arith.constant dense<0.000000e+00> : vector<8x384xf32>
    %129 = tpu.matmul %128, %127, %cst_30 {dimension_numbers = #tpu.dot_dimension_numbers<[1], [0], [0], [1], [0, 0, 1, 1], [], []>} : vector<8x128xbf16>, vector<128x384xbf16>, vector<8x384xf32> -> vector<8x384xf32>
    %130 = vector.extract_strided_slice %126 {offsets = [0, 0], sizes = [8, 128], strides = [1, 1]} : vector<8x384xf32> to vector<8x128xf32>
    %131 = vector.extract_strided_slice %129 {offsets = [0, 0], sizes = [8, 128], strides = [1, 1]} : vector<8x384xf32> to vector<8x128xf32>
    %132 = arith.addf %130, %131 : vector<8x128xf32>
    %133 = arith.negf %132 : vector<8x128xf32>
    %134 = math.exp %133 : vector<8x128xf32>
    %cst_31 = arith.constant 1.000000e+00 : f32
    %135 = vector.broadcast %cst_31 : f32 to vector<8x128xf32>
    %136 = arith.addf %135, %134 : vector<8x128xf32>
    %137 = arith.divf %135, %136 : vector<8x128xf32>
    %138 = vector.extract_strided_slice %126 {offsets = [0, 128], sizes = [8, 128], strides = [1, 1]} : vector<8x384xf32> to vector<8x128xf32>
    %139 = vector.extract_strided_slice %129 {offsets = [0, 128], sizes = [8, 128], strides = [1, 1]} : vector<8x384xf32> to vector<8x128xf32>
    %140 = arith.addf %138, %139 : vector<8x128xf32>
    %141 = arith.negf %140 : vector<8x128xf32>
    %142 = math.exp %141 : vector<8x128xf32>
    %cst_32 = arith.constant 1.000000e+00 : f32
    %143 = vector.broadcast %cst_32 : f32 to vector<8x128xf32>
    %144 = arith.addf %143, %142 : vector<8x128xf32>
    %145 = arith.divf %143, %144 : vector<8x128xf32>
    %146 = vector.extract_strided_slice %126 {offsets = [0, 256], sizes = [8, 128], strides = [1, 1]} : vector<8x384xf32> to vector<8x128xf32>
    %147 = vector.extract_strided_slice %129 {offsets = [0, 256], sizes = [8, 128], strides = [1, 1]} : vector<8x384xf32> to vector<8x128xf32>
    %148 = arith.addf %147, %8 : vector<8x128xf32>
    %149 = arith.mulf %137, %148 : vector<8x128xf32>
    %150 = arith.addf %146, %149 : vector<8x128xf32>
    %151 = math.tanh %150 : vector<8x128xf32>
    %152 = arith.subf %125, %151 : vector<8x128xf32>
    %153 = arith.mulf %145, %152 : vector<8x128xf32>
    %154 = arith.addf %151, %153 : vector<8x128xf32>
    %155 = vector.extract_strided_slice %5 {offsets = [40, 0], sizes = [8, 384], strides = [1, 1]} : vector<64x384xf32> to vector<8x384xf32>
    %c0_33 = arith.constant 0 : index
    %c0_34 = arith.constant 0 : index
    %156 = vector.load %arg3[%c0_33, %c0_34] : memref<128x384xbf16, #tpu.memory_space<vmem>>, vector<128x384xbf16>
    %157 = arith.truncf %154 : vector<8x128xf32> to vector<8x128xbf16>
    %cst_35 = arith.constant dense<0.000000e+00> : vector<8x384xf32>
    %158 = tpu.matmul %157, %156, %cst_35 {dimension_numbers = #tpu.dot_dimension_numbers<[1], [0], [0], [1], [0, 0, 1, 1], [], []>} : vector<8x128xbf16>, vector<128x384xbf16>, vector<8x384xf32> -> vector<8x384xf32>
    %159 = vector.extract_strided_slice %155 {offsets = [0, 0], sizes = [8, 128], strides = [1, 1]} : vector<8x384xf32> to vector<8x128xf32>
    %160 = vector.extract_strided_slice %158 {offsets = [0, 0], sizes = [8, 128], strides = [1, 1]} : vector<8x384xf32> to vector<8x128xf32>
    %161 = arith.addf %159, %160 : vector<8x128xf32>
    %162 = arith.negf %161 : vector<8x128xf32>
    %163 = math.exp %162 : vector<8x128xf32>
    %cst_36 = arith.constant 1.000000e+00 : f32
    %164 = vector.broadcast %cst_36 : f32 to vector<8x128xf32>
    %165 = arith.addf %164, %163 : vector<8x128xf32>
    %166 = arith.divf %164, %165 : vector<8x128xf32>
    %167 = vector.extract_strided_slice %155 {offsets = [0, 128], sizes = [8, 128], strides = [1, 1]} : vector<8x384xf32> to vector<8x128xf32>
    %168 = vector.extract_strided_slice %158 {offsets = [0, 128], sizes = [8, 128], strides = [1, 1]} : vector<8x384xf32> to vector<8x128xf32>
    %169 = arith.addf %167, %168 : vector<8x128xf32>
    %170 = arith.negf %169 : vector<8x128xf32>
    %171 = math.exp %170 : vector<8x128xf32>
    %cst_37 = arith.constant 1.000000e+00 : f32
    %172 = vector.broadcast %cst_37 : f32 to vector<8x128xf32>
    %173 = arith.addf %172, %171 : vector<8x128xf32>
    %174 = arith.divf %172, %173 : vector<8x128xf32>
    %175 = vector.extract_strided_slice %155 {offsets = [0, 256], sizes = [8, 128], strides = [1, 1]} : vector<8x384xf32> to vector<8x128xf32>
    %176 = vector.extract_strided_slice %158 {offsets = [0, 256], sizes = [8, 128], strides = [1, 1]} : vector<8x384xf32> to vector<8x128xf32>
    %177 = arith.addf %176, %8 : vector<8x128xf32>
    %178 = arith.mulf %166, %177 : vector<8x128xf32>
    %179 = arith.addf %175, %178 : vector<8x128xf32>
    %180 = math.tanh %179 : vector<8x128xf32>
    %181 = arith.subf %154, %180 : vector<8x128xf32>
    %182 = arith.mulf %174, %181 : vector<8x128xf32>
    %183 = arith.addf %180, %182 : vector<8x128xf32>
    %184 = vector.extract_strided_slice %5 {offsets = [48, 0], sizes = [8, 384], strides = [1, 1]} : vector<64x384xf32> to vector<8x384xf32>
    %c0_38 = arith.constant 0 : index
    %c0_39 = arith.constant 0 : index
    %185 = vector.load %arg3[%c0_38, %c0_39] : memref<128x384xbf16, #tpu.memory_space<vmem>>, vector<128x384xbf16>
    %186 = arith.truncf %183 : vector<8x128xf32> to vector<8x128xbf16>
    %cst_40 = arith.constant dense<0.000000e+00> : vector<8x384xf32>
    %187 = tpu.matmul %186, %185, %cst_40 {dimension_numbers = #tpu.dot_dimension_numbers<[1], [0], [0], [1], [0, 0, 1, 1], [], []>} : vector<8x128xbf16>, vector<128x384xbf16>, vector<8x384xf32> -> vector<8x384xf32>
    %188 = vector.extract_strided_slice %184 {offsets = [0, 0], sizes = [8, 128], strides = [1, 1]} : vector<8x384xf32> to vector<8x128xf32>
    %189 = vector.extract_strided_slice %187 {offsets = [0, 0], sizes = [8, 128], strides = [1, 1]} : vector<8x384xf32> to vector<8x128xf32>
    %190 = arith.addf %188, %189 : vector<8x128xf32>
    %191 = arith.negf %190 : vector<8x128xf32>
    %192 = math.exp %191 : vector<8x128xf32>
    %cst_41 = arith.constant 1.000000e+00 : f32
    %193 = vector.broadcast %cst_41 : f32 to vector<8x128xf32>
    %194 = arith.addf %193, %192 : vector<8x128xf32>
    %195 = arith.divf %193, %194 : vector<8x128xf32>
    %196 = vector.extract_strided_slice %184 {offsets = [0, 128], sizes = [8, 128], strides = [1, 1]} : vector<8x384xf32> to vector<8x128xf32>
    %197 = vector.extract_strided_slice %187 {offsets = [0, 128], sizes = [8, 128], strides = [1, 1]} : vector<8x384xf32> to vector<8x128xf32>
    %198 = arith.addf %196, %197 : vector<8x128xf32>
    %199 = arith.negf %198 : vector<8x128xf32>
    %200 = math.exp %199 : vector<8x128xf32>
    %cst_42 = arith.constant 1.000000e+00 : f32
    %201 = vector.broadcast %cst_42 : f32 to vector<8x128xf32>
    %202 = arith.addf %201, %200 : vector<8x128xf32>
    %203 = arith.divf %201, %202 : vector<8x128xf32>
    %204 = vector.extract_strided_slice %184 {offsets = [0, 256], sizes = [8, 128], strides = [1, 1]} : vector<8x384xf32> to vector<8x128xf32>
    %205 = vector.extract_strided_slice %187 {offsets = [0, 256], sizes = [8, 128], strides = [1, 1]} : vector<8x384xf32> to vector<8x128xf32>
    %206 = arith.addf %205, %8 : vector<8x128xf32>
    %207 = arith.mulf %195, %206 : vector<8x128xf32>
    %208 = arith.addf %204, %207 : vector<8x128xf32>
    %209 = math.tanh %208 : vector<8x128xf32>
    %210 = arith.subf %183, %209 : vector<8x128xf32>
    %211 = arith.mulf %203, %210 : vector<8x128xf32>
    %212 = arith.addf %209, %211 : vector<8x128xf32>
    %213 = vector.extract_strided_slice %5 {offsets = [56, 0], sizes = [8, 384], strides = [1, 1]} : vector<64x384xf32> to vector<8x384xf32>
    %c0_43 = arith.constant 0 : index
    %c0_44 = arith.constant 0 : index
    %214 = vector.load %arg3[%c0_43, %c0_44] : memref<128x384xbf16, #tpu.memory_space<vmem>>, vector<128x384xbf16>
    %215 = arith.truncf %212 : vector<8x128xf32> to vector<8x128xbf16>
    %cst_45 = arith.constant dense<0.000000e+00> : vector<8x384xf32>
    %216 = tpu.matmul %215, %214, %cst_45 {dimension_numbers = #tpu.dot_dimension_numbers<[1], [0], [0], [1], [0, 0, 1, 1], [], []>} : vector<8x128xbf16>, vector<128x384xbf16>, vector<8x384xf32> -> vector<8x384xf32>
    %217 = vector.extract_strided_slice %213 {offsets = [0, 0], sizes = [8, 128], strides = [1, 1]} : vector<8x384xf32> to vector<8x128xf32>
    %218 = vector.extract_strided_slice %216 {offsets = [0, 0], sizes = [8, 128], strides = [1, 1]} : vector<8x384xf32> to vector<8x128xf32>
    %219 = arith.addf %217, %218 : vector<8x128xf32>
    %220 = arith.negf %219 : vector<8x128xf32>
    %221 = math.exp %220 : vector<8x128xf32>
    %cst_46 = arith.constant 1.000000e+00 : f32
    %222 = vector.broadcast %cst_46 : f32 to vector<8x128xf32>
    %223 = arith.addf %222, %221 : vector<8x128xf32>
    %224 = arith.divf %222, %223 : vector<8x128xf32>
    %225 = vector.extract_strided_slice %213 {offsets = [0, 128], sizes = [8, 128], strides = [1, 1]} : vector<8x384xf32> to vector<8x128xf32>
    %226 = vector.extract_strided_slice %216 {offsets = [0, 128], sizes = [8, 128], strides = [1, 1]} : vector<8x384xf32> to vector<8x128xf32>
    %227 = arith.addf %225, %226 : vector<8x128xf32>
    %228 = arith.negf %227 : vector<8x128xf32>
    %229 = math.exp %228 : vector<8x128xf32>
    %cst_47 = arith.constant 1.000000e+00 : f32
    %230 = vector.broadcast %cst_47 : f32 to vector<8x128xf32>
    %231 = arith.addf %230, %229 : vector<8x128xf32>
    %232 = arith.divf %230, %231 : vector<8x128xf32>
    %233 = vector.extract_strided_slice %213 {offsets = [0, 256], sizes = [8, 128], strides = [1, 1]} : vector<8x384xf32> to vector<8x128xf32>
    %234 = vector.extract_strided_slice %216 {offsets = [0, 256], sizes = [8, 128], strides = [1, 1]} : vector<8x384xf32> to vector<8x128xf32>
    %235 = arith.addf %234, %8 : vector<8x128xf32>
    %236 = arith.mulf %224, %235 : vector<8x128xf32>
    %237 = arith.addf %233, %236 : vector<8x128xf32>
    %238 = math.tanh %237 : vector<8x128xf32>
    %239 = arith.subf %212, %238 : vector<8x128xf32>
    %240 = arith.mulf %232, %239 : vector<8x128xf32>
    %241 = arith.addf %238, %240 : vector<8x128xf32>
    %242 = tpu.concatenate %38, %67, %96, %125, %154, %183, %212, %241 in 0 : vector<8x128xf32>, vector<8x128xf32>, vector<8x128xf32>, vector<8x128xf32>, vector<8x128xf32>, vector<8x128xf32>, vector<8x128xf32>, vector<8x128xf32> -> vector<64x128xf32>
    %c0_48 = arith.constant 0 : index
    %c0_49 = arith.constant 0 : index
    %243 = vector.load %arg9[%c0_48, %c0_49] : memref<64x128xf32, #tpu.memory_space<vmem>>, vector<64x128xf32>
    tpu.vector_store %arg9[%c0_48, %c0_49], %242 {strides = array<i32>} : memref<64x128xf32, #tpu.memory_space<vmem>>, vector<64x128xf32>,
    %244 = arith.truncf %242 : vector<64x128xf32> to vector<64x128xbf16>
    %c0_50 = arith.constant 0 : index
    %c0_51 = arith.constant 0 : index
    %245 = vector.load %arg6[%c0_50, %c0_51] : memref<128x128xbf16, #tpu.memory_space<vmem>>, vector<128x128xbf16>
    %cst_52 = arith.constant dense<0.000000e+00> : vector<64x128xf32>
    %246 = tpu.matmul %244, %245, %cst_52 {dimension_numbers = #tpu.dot_dimension_numbers<[1], [0], [0], [1], [0, 0, 1, 1], [], []>} : vector<64x128xbf16>, vector<128x128xbf16>, vector<64x128xf32> -> vector<64x128xf32>
    %c0_53 = arith.constant 0 : index
    %c0_54 = arith.constant 0 : index
    %247 = vector.load %arg7[%c0_53, %c0_54] : memref<1x128xf32, #tpu.memory_space<vmem>>, vector<1x128xf32>
    %248 = vector.broadcast %247 : vector<1x128xf32> to vector<64x128xf32>
    %249 = arith.addf %246, %248 : vector<64x128xf32>
    %c0_55 = arith.constant 0 : index
    %c0_56 = arith.constant 0 : index
    %250 = vector.load %arg8[%c0_55, %c0_56] : memref<64x128xf32, #tpu.memory_space<vmem>>, vector<64x128xf32>
    tpu.vector_store %arg8[%c0_55, %c0_56], %249 {strides = array<i32>} : memref<64x128xf32, #tpu.memory_space<vmem>>, vector<64x128xf32>,
    return
  }
  func.func @transform_0(%arg0: i32) -> (i32, i32) {
    %c0_i32 = arith.constant 0 : i32
    %c0_i32_0 = arith.constant 0 : i32
    %c0_i32_1 = arith.constant 0 : i32
    return %c0_i32, %c0_i32_0 : i32, i32
  }
  func.func @transform_1(%arg0: i32) -> (i32, i32) {
    %c0_i32 = arith.constant 0 : i32
    %c0_i32_0 = arith.constant 0 : i32
    %c0_i32_1 = arith.constant 0 : i32
    return %c0_i32, %c0_i32_0 : i32, i32
  }
  func.func @transform_2(%arg0: i32) -> (i32, i32) {
    %c0_i32 = arith.constant 0 : i32
    %c0_i32_0 = arith.constant 0 : i32
    %c0_i32_1 = arith.constant 0 : i32
    return %c0_i32, %c0_i32_0 : i32, i32
  }
  func.func @transform_3(%arg0: i32) -> (i32, i32) {
    %c0_i32 = arith.constant 0 : i32
    %c0_i32_0 = arith.constant 0 : i32
    %c0_i32_1 = arith.constant 0 : i32
    return %c0_i32, %c0_i32_0 : i32, i32
  }
  func.func @transform_4(%arg0: i32) -> (i32, i32) {
    %c0_i32 = arith.constant 0 : i32
    %c0_i32_0 = arith.constant 0 : i32
    %c0_i32_1 = arith.constant 0 : i32
    return %c0_i32, %c0_i32_0 : i32, i32
  }
  func.func @transform_5(%arg0: i32) -> (i32, i32) {
    %c0_i32 = arith.constant 0 : i32
    %c0_i32_0 = arith.constant 0 : i32
    %c0_i32_1 = arith.constant 0 : i32
    return %c0_i32, %c0_i32_0 : i32, i32
  }
  func.func @transform_6(%arg0: i32) -> (i32, i32) {
    %c0_i32 = arith.constant 0 : i32
    %c0_i32_0 = arith.constant 0 : i32
    %c0_i32_1 = arith.constant 0 : i32
    return %c0_i32, %c0_i32_0 : i32, i32
  }
  func.func @transform_7(%arg0: i32) -> (i32, i32) {
    %c0_i32 = arith.constant 0 : i32
    %c0_i32_0 = arith.constant 0 : i32
    %c0_i32_1 = arith.constant 0 : i32
    return %c0_i32, %c0_i32_0 : i32, i32
  }
  func.func @transform_8(%arg0: i32) -> (i32, i32) {
    %c0_i32 = arith.constant 0 : i32
    %c0_i32_0 = arith.constant 0 : i32
    %c0_i32_1 = arith.constant 0 : i32
    return %c0_i32, %c0_i32_0 : i32, i32
  }
}

</mosaic_0001>

<llo_original>
// kernel: working_memory_net_forward.1
$region0: #{working_memory_net_forward.1}
  #allocation0 [shape = 'u32[]', space=smem, size = 0x4, offset = 0x4, fixed_abs, tag = 'smem constant byte address 0x4 - core index']
  #allocation1 [shape = 'u32[144,128]{1,0:T(1,128)}', space=vmem, size = 0x12000, scoped, tag = 'internal scratch']
  %s0 = inlined_call_operand.vmem [shape: bf16[64,4], index: 0, kind: input, shape index: {}]
  %s1 = inlined_call_operand.vmem [shape: bf16[4,384], index: 1, kind: input, shape index: {}]
  %s2 = inlined_call_operand.vmem [shape: bf16[128,384], index: 2, kind: input, shape index: {}]
  %s3 = inlined_call_operand.vmem [shape: f32[1,384], index: 3, kind: input, shape index: {}]
  %s4 = inlined_call_operand.vmem [shape: f32[1,128], index: 4, kind: input, shape index: {}]
  %s5 = inlined_call_operand.vmem [shape: bf16[128,128], index: 5, kind: input, shape index: {}]
  %s6 = inlined_call_operand.vmem [shape: f32[1,128], index: 6, kind: input, shape index: {}]
  %s7 = inlined_call_operand.vmem [shape: f32[64,128], index: 7, kind: output, shape index: {0}]
  %s8 = inlined_call_operand.vmem [shape: f32[64,128], index: 8, kind: output, shape index: {1}]
  %9 = xla_tuple %s7, %s8
  %s10 = sld [smem:[#allocation0]]
  $region46: #{working_memory_net_forward.1} parent=0
    _
  %s12 = ssub.s32 1, %s10
  %s13 = scalar_select 0, %s12, %s10
  // Predicated region
  $region2: #{working_memory_net_forward.1} parent=0 // pred_check
    _
  $region3: #{working_memory_net_forward.1} parent=0 // pred_check_branch
    %15 = sbr.rel (0) target = $region5
  $region4: #{working_memory_net_forward.1} parent=0 // pred_region
    _
  $region5: #{working_memory_net_forward.1} parent=0 // pred_fallthru
    _
  // Predicated region
  $region6: #{working_memory_net_forward.1} parent=0 // pred_check
    _
  $region7: #{working_memory_net_forward.1} parent=0 // pred_check_branch
    %17 = sbr.rel (0) target = $region9
  $region8: #{working_memory_net_forward.1} parent=0 // pred_region
    _
  $region9: #{working_memory_net_forward.1} parent=0 // pred_fallthru
    _
  // Predicated region
  $region10: #{working_memory_net_forward.1} parent=0 // pred_check
    _
  $region11: #{working_memory_net_forward.1} parent=0 // pred_check_branch
    %19 = sbr.rel (0) target = $region13
  $region12: #{working_memory_net_forward.1} parent=0 // pred_region
    _
  $region13: #{working_memory_net_forward.1} parent=0 // pred_fallthru
    _
  // Predicated region
  $region14: #{working_memory_net_forward.1} parent=0 // pred_check
    _
  $region15: #{working_memory_net_forward.1} parent=0 // pred_check_branch
    %21 = sbr.rel (0) target = $region17
  $region16: #{working_memory_net_forward.1} parent=0 // pred_region
    _
  $region17: #{working_memory_net_forward.1} parent=0 // pred_fallthru
    _
  // Predicated region
  $region18: #{working_memory_net_forward.1} parent=0 // pred_check
    _
  $region19: #{working_memory_net_forward.1} parent=0 // pred_check_branch
    %23 = sbr.rel (0) target = $region21
  $region20: #{working_memory_net_forward.1} parent=0 // pred_region
    _
  $region21: #{working_memory_net_forward.1} parent=0 // pred_fallthru
    _
  // Predicated region
  $region22: #{working_memory_net_forward.1} parent=0 // pred_check
    _
  $region23: #{working_memory_net_forward.1} parent=0 // pred_check_branch
    %25 = sbr.rel (0) target = $region25
  $region24: #{working_memory_net_forward.1} parent=0 // pred_region
    _
  $region25: #{working_memory_net_forward.1} parent=0 // pred_fallthru
    _
  // Predicated region
  $region26: #{working_memory_net_forward.1} parent=0 // pred_check
    _
  $region27: #{working_memory_net_forward.1} parent=0 // pred_check_branch
    %27 = sbr.rel (0) target = $region29
  $region28: #{working_memory_net_forward.1} parent=0 // pred_region
    _
  $region29: #{working_memory_net_forward.1} parent=0 // pred_fallthru
    _
  %v29 = vld [vmem:[%s0] sm:$0xf]
  %v30 = vld [vmem:[%s0 + $0x4] sm:$0xf]
  %v31 = vld [vmem:[%s0 + $0x8] sm:$0xf]
  %v32 = vld [vmem:[%s0 + $0xc] sm:$0xf]
  %v33 = vld [vmem:[%s0 + $0x10] sm:$0xf]
  %v34 = vld [vmem:[%s0 + $0x14] sm:$0xf]
  %v35 = vld [vmem:[%s0 + $0x18] sm:$0xf]
  %v36 = vld [vmem:[%s0 + $0x1c] sm:$0xf]
  %v37 = vld [vmem:[%s1] sm:$0x3f]
  %v38 = vld [vmem:[%s3] sm:$0x7]
  %v40 = vlaneseq
  %v41 = vshrl.u32 %v40, 7
  %v42 = vsub.s32 0, %v41
  %v43 = vrot.slane %v38, %v42
  %v44 = vlaneseq
  %v45 = vshrl.u32 %v44, 7
  %v46 = vsub.s32 1, %v45
  %v47 = vrot.slane %v38, %v46
  %v48 = vlaneseq
  %v49 = vshrl.u32 %v48, 7
  %v50 = vsub.s32 2, %v49
  %v51 = vrot.slane %v38, %v50
  %v63 = vunpack.c.l.b16 %v29
  %v64 = vunpack.c.l.b16 %v30
  %v65 = vunpack.c.l.b16 %v31
  %v66 = vunpack.c.l.b16 %v32
  %v67 = vunpack.c.l.b16 %v33
  %v68 = vunpack.c.l.b16 %v34
  %v69 = vunpack.c.l.b16 %v35
  %v70 = vunpack.c.l.b16 %v36
  %v71 = vpack.c.b16 %v64, %v63
  %v72 = vpack.c.b16 %v66, %v65
  %v73 = vpack.c.b16 %v68, %v67
  %v74 = vpack.c.b16 %v70, %v69
  %v76 = vcombine.high %v37, %v37
  %v78 = vunpack.c.l.s4 1983009808
  %v79 = vunpack.c.0.s8 %v78
  %v80 = vlaneseq
  %v81 = vshrl.u32 %v80, 7
  %v82 = vsub.s32 %v79, %v81
  %v83 = vrot.slane %v37, %v82
  %v85 = vunpack.c.l.s4 1983009808
  %v86 = vunpack.c.0.s8 %v85
  %v87 = vlaneseq
  %v88 = vshrl.u32 %v87, 7
  %v89 = vsub.s32 %v86, %v88
  %v90 = vrot.slane %v76, %v89
  %v91 = vcombine.high %v83, %v83
  %vm92 = vcmask 31744
  %v94 = vsel %vm92, %v71, 0
  %v97 = vsel %vm92, %v72, 0
  %v100 = vsel %vm92, %v73, 0
  %v103 = vsel %vm92, %v74, 0
  %vm105 = vcmask 1041408
  %v107 = vsel %vm105, %v83, 0
  %v110 = vsel %vm105, %v91, 0
  %v113 = vsel %vm105, %v90, 0
  %115 = vmatprep.subr.bf16.mxu0 %v110
  %116 = vmatpush1.bf16.msra.mxu0 %v107
  %117 = vmatprep.subr.bf16.mxu0 0
  %118 = vmatpush1.bf16.msra.mxu0 0
  %119 = vmatprep.subr.bf16.mxu0 0
  %120 = vmatpush1.bf16.msra.mxu0 0
  %121 = vmatprep.subr.bf16.mxu0 0
  %122 = vmatpush1.bf16.msra.mxu0 0
  %123 = vmatprep.subr.bf16.mxu0 0
  %124 = vmatpush1.bf16.msra.mxu0 0
  %125 = vmatprep.subr.bf16.mxu0 0
  %126 = vmatpush1.bf16.msra.mxu0 0
  %127 = vmatprep.subr.bf16.mxu0 0
  %128 = vmatpush1.bf16.msra.mxu0 0
  %129 = vmatprep.subr.bf16.mxu0 0
  %130 = vmatpush1.bf16.msra.mxu0 0
  %131 = vmatprep.subr.bf16.mxu0 0
  %132 = vmatpush1.bf16.msra.mxu0 0
  %133 = vmatprep.subr.bf16.mxu0 0
  %134 = vmatpush1.bf16.msra.mxu0 0
  %135 = vmatprep.subr.bf16.mxu0 0
  %136 = vmatpush1.bf16.msra.mxu0 0
  %137 = vmatprep.subr.bf16.mxu0 0
  %138 = vmatpush1.bf16.msra.mxu0 0
  %139 = vmatprep.subr.bf16.mxu0 0
  %140 = vmatpush1.bf16.msra.mxu0 0
  %141 = vmatprep.subr.bf16.mxu0 0
  %142 = vmatpush1.bf16.msra.mxu0 0
  %143 = vmatprep.subr.bf16.mxu0 0
  %144 = vmatpush1.bf16.msra.mxu0 0
  %145 = vmatprep.subr.bf16.mxu0 0
  %146 = vmatpush1.bf16.msra.mxu0 0
  %147 = vmatprep.mubr.bf16.mxu0 0
  %148 = vmatmul.mubr.bf16.gmra.mrb[0].mxu0 %v94
  %v149 = vpop.f32.mrb[0].mxu0
  %v150 = vadd.f32 %v43, %v149
  %v151 = vpop.f32.mrb[0].mxu0
  %v152 = vadd.f32 %v47, %v151
  %v153 = vpop.f32.mrb[0].mxu0
  %v154 = vadd.f32 %v43, %v153
  %v155 = vpop.f32.mrb[0].mxu0
  %v156 = vadd.f32 %v47, %v155
  %157 = vmatprep.mubr.bf16.mxu0 0
  %158 = vmatmul.mubr.bf16.gmra.mrb[0].mxu0 %v97
  %v159 = vpop.f32.mrb[0].mxu0
  %v160 = vadd.f32 %v43, %v159
  %v161 = vpop.f32.mrb[0].mxu0
  %v162 = vadd.f32 %v47, %v161
  %v163 = vpop.f32.mrb[0].mxu0
  %v164 = vadd.f32 %v43, %v163
  %v165 = vpop.f32.mrb[0].mxu0
  %v166 = vadd.f32 %v47, %v165
  %167 = vmatprep.mubr.bf16.mxu0 0
  %168 = vmatmul.mubr.bf16.gmra.mrb[0].mxu0 %v100
  %v169 = vpop.f32.mrb[0].mxu0
  %v170 = vadd.f32 %v43, %v169
  %v171 = vpop.f32.mrb[0].mxu0
  %v172 = vadd.f32 %v47, %v171
  %v173 = vpop.f32.mrb[0].mxu0
  %v174 = vadd.f32 %v43, %v173
  %v175 = vpop.f32.mrb[0].mxu0
  %v176 = vadd.f32 %v47, %v175
  %177 = vmatprep.mubr.bf16.mxu0 0
  %178 = vmatmul.mubr.bf16.gmra.mrb[0].mxu0 %v103
  %v179 = vpop.f32.mrb[0].mxu0
  %v180 = vadd.f32 %v43, %v179
  %v181 = vpop.f32.mrb[0].mxu0
  %v182 = vadd.f32 %v47, %v181
  %v183 = vpop.f32.mrb[0].mxu0
  %v184 = vadd.f32 %v43, %v183
  %v185 = vpop.f32.mrb[0].mxu0
  %v186 = vadd.f32 %v47, %v185
  %187 = vdwg.mxu0
  %188 = vmatprep.subr.bf16.mxu0 0
  %189 = vmatpush1.bf16.msra.mxu0 %v113
  %190 = vmatprep.subr.bf16.mxu0 0
  %191 = vmatpush1.bf16.msra.mxu0 0
  %192 = vmatprep.subr.bf16.mxu0 0
  %193 = vmatpush1.bf16.msra.mxu0 0
  %194 = vmatprep.subr.bf16.mxu0 0
  %195 = vmatpush1.bf16.msra.mxu0 0
  %196 = vmatprep.subr.bf16.mxu0 0
  %197 = vmatpush1.bf16.msra.mxu0 0
  %198 = vmatprep.subr.bf16.mxu0 0
  %199 = vmatpush1.bf16.msra.mxu0 0
  %200 = vmatprep.subr.bf16.mxu0 0
  %201 = vmatpush1.bf16.msra.mxu0 0
  %202 = vmatprep.subr.bf16.mxu0 0
  %203 = vmatpush1.bf16.msra.mxu0 0
  %204 = vmatprep.subr.bf16.mxu0 0
  %205 = vmatpush1.bf16.msra.mxu0 0
  %206 = vmatprep.subr.bf16.mxu0 0
  %207 = vmatpush1.bf16.msra.mxu0 0
  %208 = vmatprep.subr.bf16.mxu0 0
  %209 = vmatpush1.bf16.msra.mxu0 0
  %210 = vmatprep.subr.bf16.mxu0 0
  %211 = vmatpush1.bf16.msra.mxu0 0
  %212 = vmatprep.subr.bf16.mxu0 0
  %213 = vmatpush1.bf16.msra.mxu0 0
  %214 = vmatprep.subr.bf16.mxu0 0
  %215 = vmatpush1.bf16.msra.mxu0 0
  %216 = vmatprep.subr.bf16.mxu0 0
  %217 = vmatpush1.bf16.msra.mxu0 0
  %218 = vmatprep.subr.bf16.mxu0 0
  %219 = vmatpush1.bf16.msra.mxu0 0
  %220 = vmatprep.mubr.bf16.mxu0 0
  %221 = vmatmul.mubr.bf16.gmra.mrb[0].mxu0 %v94
  %v222 = vpop.f32.mrb[0].mxu0
  %v223 = vadd.f32 %v51, %v222
  %v224 = vpop.f32.mrb[0].mxu0
  %v225 = vpop.f32.mrb[0].mxu0
  %v226 = vadd.f32 %v51, %v225
  %v227 = vpop.f32.mrb[0].mxu0
  %228 = vmatprep.mubr.bf16.mxu0 0
  %229 = vmatmul.mubr.bf16.gmra.mrb[0].mxu0 %v97
  %v230 = vpop.f32.mrb[0].mxu0
  %v231 = vadd.f32 %v51, %v230
  %v232 = vpop.f32.mrb[0].mxu0
  %v233 = vpop.f32.mrb[0].mxu0
  %v234 = vadd.f32 %v51, %v233
  %v235 = vpop.f32.mrb[0].mxu0
  %236 = vmatprep.mubr.bf16.mxu0 0
  %237 = vmatmul.mubr.bf16.gmra.mrb[0].mxu0 %v100
  %v238 = vpop.f32.mrb[0].mxu0
  %v239 = vadd.f32 %v51, %v238
  %v240 = vpop.f32.mrb[0].mxu0
  %v241 = vpop.f32.mrb[0].mxu0
  %v242 = vadd.f32 %v51, %v241
  %v243 = vpop.f32.mrb[0].mxu0
  %244 = vmatprep.mubr.bf16.mxu0 0
  %245 = vmatmul.mubr.bf16.gmra.mrb[0].mxu0 %v103
  %v246 = vpop.f32.mrb[0].mxu0
  %v247 = vadd.f32 %v51, %v246
  %v248 = vpop.f32.mrb[0].mxu0
  %v249 = vpop.f32.mrb[0].mxu0
  %v250 = vadd.f32 %v51, %v249
  %v251 = vpop.f32.mrb[0].mxu0
  %252 = vdwg.mxu0
  %v253 = vld [vmem:[%s4] sm:$0x1]
  %v255 = vlaneseq
  %v256 = vshrl.u32 %v255, 7
  %v257 = vsub.s32 0, %v256
  %v258 = vrot.slane %v253, %v257
  %v260 = vld [vmem:[%s2] sm:$0xff]
  %v261 = vld [vmem:[%s2 + $0x8] sm:$0xf]
  %v262 = vld [vmem:[%s2 + $0xc] sm:$0xff]
  %v263 = vld [vmem:[%s2 + $0x14] sm:$0xf]
  %v264 = vld [vmem:[%s2 + $0x18] sm:$0xff]
  %v265 = vld [vmem:[%s2 + $0x20] sm:$0xf]
  %v266 = vld [vmem:[%s2 + $0x24] sm:$0xff]
  %v267 = vld [vmem:[%s2 + $0x2c] sm:$0xf]
  %v268 = vld [vmem:[%s2 + $0x30] sm:$0xff]
  %v269 = vld [vmem:[%s2 + $0x38] sm:$0xf]
  %v270 = vld [vmem:[%s2 + $0x3c] sm:$0xff]
  %v271 = vld [vmem:[%s2 + $0x44] sm:$0xf]
  %v272 = vld [vmem:[%s2 + $0x48] sm:$0xff]
  %v273 = vld [vmem:[%s2 + $0x50] sm:$0xf]
  %v274 = vld [vmem:[%s2 + $0x54] sm:$0xff]
  %v275 = vld [vmem:[%s2 + $0x5c] sm:$0xf]
  %v276 = vld [vmem:[%s2 + $0x60] sm:$0xff]
  %v277 = vld [vmem:[%s2 + $0x68] sm:$0xf]
  %v278 = vld [vmem:[%s2 + $0x6c] sm:$0xff]
  %v279 = vld [vmem:[%s2 + $0x74] sm:$0xf]
  %v280 = vld [vmem:[%s2 + $0x78] sm:$0xff]
  %v281 = vld [vmem:[%s2 + $0x80] sm:$0xf]
  %v282 = vld [vmem:[%s2 + $0x84] sm:$0xff]
  %v283 = vld [vmem:[%s2 + $0x8c] sm:$0xf]
  %v284 = vld [vmem:[%s2 + $0x90] sm:$0xff]
  %v285 = vld [vmem:[%s2 + $0x98] sm:$0xf]
  %v286 = vld [vmem:[%s2 + $0x9c] sm:$0xff]
  %v287 = vld [vmem:[%s2 + $0xa4] sm:$0xf]
  %v288 = vld [vmem:[%s2 + $0xa8] sm:$0xff]
  %v289 = vld [vmem:[%s2 + $0xb0] sm:$0xf]
  %v290 = vld [vmem:[%s2 + $0xb4] sm:$0xff]
  %v291 = vld [vmem:[%s2 + $0xbc] sm:$0xf]
  %v324 = vunpack.c.l.b16 %v260
  %v325 = vunpack.c.h.b16 %v260
  %v326 = vunpack.c.l.b16 %v261
  %v327 = vunpack.c.l.b16 %v262
  %v328 = vunpack.c.h.b16 %v262
  %v329 = vunpack.c.l.b16 %v263
  %v330 = vunpack.c.l.b16 %v264
  %v331 = vunpack.c.h.b16 %v264
  %v332 = vunpack.c.l.b16 %v265
  %v333 = vunpack.c.l.b16 %v266
  %v334 = vunpack.c.h.b16 %v266
  %v335 = vunpack.c.l.b16 %v267
  %v336 = vunpack.c.l.b16 %v268
  %v337 = vunpack.c.h.b16 %v268
  %v338 = vunpack.c.l.b16 %v269
  %v339 = vunpack.c.l.b16 %v270
  %v340 = vunpack.c.h.b16 %v270
  %v341 = vunpack.c.l.b16 %v271
  %v342 = vunpack.c.l.b16 %v272
  %v343 = vunpack.c.h.b16 %v272
  %v344 = vunpack.c.l.b16 %v273
  %v345 = vunpack.c.l.b16 %v274
  %v346 = vunpack.c.h.b16 %v274
  %v347 = vunpack.c.l.b16 %v275
  %v348 = vunpack.c.l.b16 %v276
  %v349 = vunpack.c.h.b16 %v276
  %v350 = vunpack.c.l.b16 %v277
  %v351 = vunpack.c.l.b16 %v278
  %v352 = vunpack.c.h.b16 %v278
  %v353 = vunpack.c.l.b16 %v279
  %v354 = vunpack.c.l.b16 %v280
  %v355 = vunpack.c.h.b16 %v280
  %v356 = vunpack.c.l.b16 %v281
  %v357 = vunpack.c.l.b16 %v282
  %v358 = vunpack.c.h.b16 %v282
  %v359 = vunpack.c.l.b16 %v283
  %v360 = vunpack.c.l.b16 %v284
  %v361 = vunpack.c.h.b16 %v284
  %v362 = vunpack.c.l.b16 %v285
  %v363 = vunpack.c.l.b16 %v286
  %v364 = vunpack.c.h.b16 %v286
  %v365 = vunpack.c.l.b16 %v287
  %v366 = vunpack.c.l.b16 %v288
  %v367 = vunpack.c.h.b16 %v288
  %v368 = vunpack.c.l.b16 %v289
  %v369 = vunpack.c.l.b16 %v290
  %v370 = vunpack.c.h.b16 %v290
  %v371 = vunpack.c.l.b16 %v291
  %v372 = vpack.c.b16 %v327, %v324
  %v373 = vpack.c.b16 %v328, %v325
  %v374 = vpack.c.b16 %v329, %v326
  %v375 = vpack.c.b16 %v333, %v330
  %v376 = vpack.c.b16 %v334, %v331
  %v377 = vpack.c.b16 %v335, %v332
  %v378 = vpack.c.b16 %v339, %v336
  %v379 = vpack.c.b16 %v340, %v337
  %v380 = vpack.c.b16 %v341, %v338
  %v381 = vpack.c.b16 %v345, %v342
  %v382 = vpack.c.b16 %v346, %v343
  %v383 = vpack.c.b16 %v347, %v344
  %v384 = vpack.c.b16 %v351, %v348
  %v385 = vpack.c.b16 %v352, %v349
  %v386 = vpack.c.b16 %v353, %v350
  %v387 = vpack.c.b16 %v357, %v354
  %v388 = vpack.c.b16 %v358, %v355
  %v389 = vpack.c.b16 %v359, %v356
  %v390 = vpack.c.b16 %v363, %v360
  %v391 = vpack.c.b16 %v364, %v361
  %v392 = vpack.c.b16 %v365, %v362
  %v393 = vpack.c.b16 %v369, %v366
  %v394 = vpack.c.b16 %v370, %v367
  %v395 = vpack.c.b16 %v371, %v368
  %420 = vmatprep.subr.bf16.mxu0 %v373
  %421 = vmatpush1.bf16.msra.mxu0 %v372
  %422 = vmatprep.subr.bf16.mxu0 %v376
  %423 = vmatpush1.bf16.msra.mxu0 %v375
  %424 = vmatprep.subr.bf16.mxu0 %v379
  %425 = vmatpush1.bf16.msra.mxu0 %v378
  %426 = vmatprep.subr.bf16.mxu0 %v382
  %427 = vmatpush1.bf16.msra.mxu0 %v381
  %428 = vmatprep.subr.bf16.mxu0 %v385
  %429 = vmatpush1.bf16.msra.mxu0 %v384
  %430 = vmatprep.subr.bf16.mxu0 %v388
  %431 = vmatpush1.bf16.msra.mxu0 %v387
  %432 = vmatprep.subr.bf16.mxu0 %v391
  %433 = vmatpush1.bf16.msra.mxu0 %v390
  %434 = vmatprep.subr.bf16.mxu0 %v394
  %435 = vmatpush1.bf16.msra.mxu0 %v393
  %436 = vmatprep.subr.bf16.mxu0 0
  %437 = vmatpush1.bf16.msra.mxu0 0
  %438 = vmatprep.subr.bf16.mxu0 0
  %439 = vmatpush1.bf16.msra.mxu0 0
  %440 = vmatprep.subr.bf16.mxu0 0
  %441 = vmatpush1.bf16.msra.mxu0 0
  %442 = vmatprep.subr.bf16.mxu0 0
  %443 = vmatpush1.bf16.msra.mxu0 0
  %444 = vmatprep.subr.bf16.mxu0 0
  %445 = vmatpush1.bf16.msra.mxu0 0
  %446 = vmatprep.subr.bf16.mxu0 0
  %447 = vmatpush1.bf16.msra.mxu0 0
  %448 = vmatprep.subr.bf16.mxu0 0
  %449 = vmatpush1.bf16.msra.mxu0 0
  %450 = vmatprep.subr.bf16.mxu0 0
  %451 = vmatpush1.bf16.msra.mxu0 0
  %452 = vmatprep.mubr.bf16.mxu0 0
  %453 = vmatmul.mubr.bf16.gmra.mrb[0].mxu0 0
  %v454 = vpop.f32.mrb[0].mxu0
  %v455 = vadd.f32 0.0, %v454
  %v456 = vpop.f32.mrb[0].mxu0
  %v457 = vadd.f32 0.0, %v456
  %v458 = vpop.f32.mrb[0].mxu0
  %v459 = vpop.f32.mrb[0].mxu0
  %460 = vdwg.mxu0
  %461 = vmatprep.subr.bf16.mxu0 0
  %462 = vmatpush1.bf16.msra.mxu0 %v374
  %463 = vmatprep.subr.bf16.mxu0 0
  %464 = vmatpush1.bf16.msra.mxu0 %v377
  %465 = vmatprep.subr.bf16.mxu0 0
  %466 = vmatpush1.bf16.msra.mxu0 %v380
  %467 = vmatprep.subr.bf16.mxu0 0
  %468 = vmatpush1.bf16.msra.mxu0 %v383
  %469 = vmatprep.subr.bf16.mxu0 0
  %470 = vmatpush1.bf16.msra.mxu0 %v386
  %471 = vmatprep.subr.bf16.mxu0 0
  %472 = vmatpush1.bf16.msra.mxu0 %v389
  %473 = vmatprep.subr.bf16.mxu0 0
  %474 = vmatpush1.bf16.msra.mxu0 %v392
  %475 = vmatprep.subr.bf16.mxu0 0
  %476 = vmatpush1.bf16.msra.mxu0 %v395
  %477 = vmatprep.subr.bf16.mxu0 0
  %478 = vmatpush1.bf16.msra.mxu0 0
  %479 = vmatprep.subr.bf16.mxu0 0
  %480 = vmatpush1.bf16.msra.mxu0 0
  %481 = vmatprep.subr.bf16.mxu0 0
  %482 = vmatpush1.bf16.msra.mxu0 0
  %483 = vmatprep.subr.bf16.mxu0 0
  %484 = vmatpush1.bf16.msra.mxu0 0
  %485 = vmatprep.subr.bf16.mxu0 0
  %486 = vmatpush1.bf16.msra.mxu0 0
  %487 = vmatprep.subr.bf16.mxu0 0
  %488 = vmatpush1.bf16.msra.mxu0 0
  %489 = vmatprep.subr.bf16.mxu0 0
  %490 = vmatpush1.bf16.msra.mxu0 0
  %491 = vmatprep.subr.bf16.mxu0 0
  %492 = vmatpush1.bf16.msra.mxu0 0
  %493 = vmatprep.mubr.bf16.mxu0 0
  %494 = vmatmul.mubr.bf16.gmra.mrb[0].mxu0 0
  %v495 = vpop.f32.mrb[0].mxu0
  %v496 = vadd.f32 0.0, %v495
  %v497 = vpop.f32.mrb[0].mxu0
  %v498 = vpop.f32.mrb[0].mxu0
  %v499 = vpop.f32.mrb[0].mxu0
  %500 = vdwg.mxu0
  %v501 = vadd.f32 %v150, %v455
  %v502 = vxor.u32 %v501, 2147483648
  %v503 = vmul.f32 %v502, 1.442695
  %v504 = vpow.pop %v503
  %v505 = vadd.f32 %v504, 1.0
  %v506 = vrcp.pop %v505
  %v507 = vmul.f32 1.0, %v506
  %v508 = vadd.f32 %v152, %v457
  %v509 = vxor.u32 %v508, 2147483648
  %v510 = vmul.f32 %v509, 1.442695
  %v511 = vpow.pop %v510
  %v512 = vadd.f32 %v511, 1.0
  %v513 = vrcp.pop %v512
  %v514 = vmul.f32 1.0, %v513
  %v515 = vadd.f32 %v496, %v258
  %v516 = vmul.f32 %v507, %v515
  %v517 = vadd.f32 %v223, %v516
  %v518 = vtanh.pop %v517
  %v519 = vsub.f32 0.0, %v518
  %v520 = vmul.f32 %v514, %v519
  %v521 = vadd.f32 %v518, %v520
  %v522 = vpack.c.bf16 %v521, %v521
  %523 = vmatprep.subr.bf16.mxu0 %v373
  %524 = vmatpush1.bf16.msra.mxu0 %v372
  %525 = vmatprep.subr.bf16.mxu0 %v376
  %526 = vmatpush1.bf16.msra.mxu0 %v375
  %527 = vmatprep.subr.bf16.mxu0 %v379
  %528 = vmatpush1.bf16.msra.mxu0 %v378
  %529 = vmatprep.subr.bf16.mxu0 %v382
  %530 = vmatpush1.bf16.msra.mxu0 %v381
  %531 = vmatprep.subr.bf16.mxu0 %v385
  %532 = vmatpush1.bf16.msra.mxu0 %v384
  %533 = vmatprep.subr.bf16.mxu0 %v388
  %534 = vmatpush1.bf16.msra.mxu0 %v387
  %535 = vmatprep.subr.bf16.mxu0 %v391
  %536 = vmatpush1.bf16.msra.mxu0 %v390
  %537 = vmatprep.subr.bf16.mxu0 %v394
  %538 = vmatpush1.bf16.msra.mxu0 %v393
  %539 = vmatprep.subr.bf16.mxu0 0
  %540 = vmatpush1.bf16.msra.mxu0 0
  %541 = vmatprep.subr.bf16.mxu0 0
  %542 = vmatpush1.bf16.msra.mxu0 0
  %543 = vmatprep.subr.bf16.mxu0 0
  %544 = vmatpush1.bf16.msra.mxu0 0
  %545 = vmatprep.subr.bf16.mxu0 0
  %546 = vmatpush1.bf16.msra.mxu0 0
  %547 = vmatprep.subr.bf16.mxu0 0
  %548 = vmatpush1.bf16.msra.mxu0 0
  %549 = vmatprep.subr.bf16.mxu0 0
  %550 = vmatpush1.bf16.msra.mxu0 0
  %551 = vmatprep.subr.bf16.mxu0 0
  %552 = vmatpush1.bf16.msra.mxu0 0
  %553 = vmatprep.subr.bf16.mxu0 0
  %554 = vmatpush1.bf16.msra.mxu0 0
  %555 = vmatprep.mubr.bf16.mxu0 0
  %556 = vmatmul.mubr.bf16.gmra.mrb[0].mxu0 %v522
  %v557 = vpop.f32.mrb[0].mxu0
  %v558 = vadd.f32 0.0, %v557
  %v559 = vpop.f32.mrb[0].mxu0
  %v560 = vadd.f32 0.0, %v559
  %v561 = vpop.f32.mrb[0].mxu0
  %v562 = vpop.f32.mrb[0].mxu0
  %563 = vdwg.mxu0
  %564 = vmatprep.subr.bf16.mxu0 0
  %565 = vmatpush1.bf16.msra.mxu0 %v374
  %566 = vmatprep.subr.bf16.mxu0 0
  %567 = vmatpush1.bf16.msra.mxu0 %v377
  %568 = vmatprep.subr.bf16.mxu0 0
  %569 = vmatpush1.bf16.msra.mxu0 %v380
  %570 = vmatprep.subr.bf16.mxu0 0
  %571 = vmatpush1.bf16.msra.mxu0 %v383
  %572 = vmatprep.subr.bf16.mxu0 0
  %573 = vmatpush1.bf16.msra.mxu0 %v386
  %574 = vmatprep.subr.bf16.mxu0 0
  %575 = vmatpush1.bf16.msra.mxu0 %v389
  %576 = vmatprep.subr.bf16.mxu0 0
  %577 = vmatpush1.bf16.msra.mxu0 %v392
  %578 = vmatprep.subr.bf16.mxu0 0
  %579 = vmatpush1.bf16.msra.mxu0 %v395
  %580 = vmatprep.subr.bf16.mxu0 0
  %581 = vmatpush1.bf16.msra.mxu0 0
  %582 = vmatprep.subr.bf16.mxu0 0
  %583 = vmatpush1.bf16.msra.mxu0 0
  %584 = vmatprep.subr.bf16.mxu0 0
  %585 = vmatpush1.bf16.msra.mxu0 0
  %586 = vmatprep.subr.bf16.mxu0 0
  %587 = vmatpush1.bf16.msra.mxu0 0
  %588 = vmatprep.subr.bf16.mxu0 0
  %589 = vmatpush1.bf16.msra.mxu0 0
  %590 = vmatprep.subr.bf16.mxu0 0
  %591 = vmatpush1.bf16.msra.mxu0 0
  %592 = vmatprep.subr.bf16.mxu0 0
  %593 = vmatpush1.bf16.msra.mxu0 0
  %594 = vmatprep.subr.bf16.mxu0 0
  %595 = vmatpush1.bf16.msra.mxu0 0
  %596 = vmatprep.mubr.bf16.mxu0 0
  %597 = vmatmul.mubr.bf16.gmra.mrb[0].mxu0 %v522
  %v598 = vpop.f32.mrb[0].mxu0
  %v599 = vadd.f32 0.0, %v598
  %v600 = vpop.f32.mrb[0].mxu0
  %v601 = vpop.f32.mrb[0].mxu0
  %v602 = vpop.f32.mrb[0].mxu0
  %603 = vdwg.mxu0
  %v604 = vadd.f32 %v154, %v558
  %v605 = vxor.u32 %v604, 2147483648
  %v606 = vmul.f32 %v605, 1.442695
  %v607 = vpow.pop %v606
  %v608 = vadd.f32 %v607, 1.0
  %v609 = vrcp.pop %v608
  %v610 = vmul.f32 1.0, %v609
  %v611 = vadd.f32 %v156, %v560
  %v612 = vxor.u32 %v611, 2147483648
  %v613 = vmul.f32 %v612, 1.442695
  %v614 = vpow.pop %v613
  %v615 = vadd.f32 %v614, 1.0
  %v616 = vrcp.pop %v615
  %v617 = vmul.f32 1.0, %v616
  %v618 = vadd.f32 %v599, %v258
  %v619 = vmul.f32 %v610, %v618
  %v620 = vadd.f32 %v226, %v619
  %v621 = vtanh.pop %v620
  %v622 = vsub.f32 %v521, %v621
  %v623 = vmul.f32 %v617, %v622
  %v624 = vadd.f32 %v621, %v623
  %v625 = vpack.c.bf16 %v624, %v624
  %626 = vmatprep.subr.bf16.mxu0 %v373
  %627 = vmatpush1.bf16.msra.mxu0 %v372
  %628 = vmatprep.subr.bf16.mxu0 %v376
  %629 = vmatpush1.bf16.msra.mxu0 %v375
  %630 = vmatprep.subr.bf16.mxu0 %v379
  %631 = vmatpush1.bf16.msra.mxu0 %v378
  %632 = vmatprep.subr.bf16.mxu0 %v382
  %633 = vmatpush1.bf16.msra.mxu0 %v381
  %634 = vmatprep.subr.bf16.mxu0 %v385
  %635 = vmatpush1.bf16.msra.mxu0 %v384
  %636 = vmatprep.subr.bf16.mxu0 %v388
  %637 = vmatpush1.bf16.msra.mxu0 %v387
  %638 = vmatprep.subr.bf16.mxu0 %v391
  %639 = vmatpush1.bf16.msra.mxu0 %v390
  %640 = vmatprep.subr.bf16.mxu0 %v394
  %641 = vmatpush1.bf16.msra.mxu0 %v393
  %642 = vmatprep.subr.bf16.mxu0 0
  %643 = vmatpush1.bf16.msra.mxu0 0
  %644 = vmatprep.subr.bf16.mxu0 0
  %645 = vmatpush1.bf16.msra.mxu0 0
  %646 = vmatprep.subr.bf16.mxu0 0
  %647 = vmatpush1.bf16.msra.mxu0 0
  %648 = vmatprep.subr.bf16.mxu0 0
  %649 = vmatpush1.bf16.msra.mxu0 0
  %650 = vmatprep.subr.bf16.mxu0 0
  %651 = vmatpush1.bf16.msra.mxu0 0
  %652 = vmatprep.subr.bf16.mxu0 0
  %653 = vmatpush1.bf16.msra.mxu0 0
  %654 = vmatprep.subr.bf16.mxu0 0
  %655 = vmatpush1.bf16.msra.mxu0 0
  %656 = vmatprep.subr.bf16.mxu0 0
  %657 = vmatpush1.bf16.msra.mxu0 0
  %658 = vmatprep.mubr.bf16.mxu0 0
  %659 = vmatmul.mubr.bf16.gmra.mrb[0].mxu0 %v625
  %v660 = vpop.f32.mrb[0].mxu0
  %v661 = vadd.f32 0.0, %v660
  %v662 = vpop.f32.mrb[0].mxu0
  %v663 = vadd.f32 0.0, %v662
  %v664 = vpop.f32.mrb[0].mxu0
  %v665 = vpop.f32.mrb[0].mxu0
  %666 = vdwg.mxu0
  %667 = vmatprep.subr.bf16.mxu0 0
  %668 = vmatpush1.bf16.msra.mxu0 %v374
  %669 = vmatprep.subr.bf16.mxu0 0
  %670 = vmatpush1.bf16.msra.mxu0 %v377
  %671 = vmatprep.subr.bf16.mxu0 0
  %672 = vmatpush1.bf16.msra.mxu0 %v380
  %673 = vmatprep.subr.bf16.mxu0 0
  %674 = vmatpush1.bf16.msra.mxu0 %v383
  %675 = vmatprep.subr.bf16.mxu0 0
  %676 = vmatpush1.bf16.msra.mxu0 %v386
  %677 = vmatprep.subr.bf16.mxu0 0
  %678 = vmatpush1.bf16.msra.mxu0 %v389
  %679 = vmatprep.subr.bf16.mxu0 0
  %680 = vmatpush1.bf16.msra.mxu0 %v392
  %681 = vmatprep.subr.bf16.mxu0 0
  %682 = vmatpush1.bf16.msra.mxu0 %v395
  %683 = vmatprep.subr.bf16.mxu0 0
  %684 = vmatpush1.bf16.msra.mxu0 0
  %685 = vmatprep.subr.bf16.mxu0 0
  %686 = vmatpush1.bf16.msra.mxu0 0
  %687 = vmatprep.subr.bf16.mxu0 0
  %688 = vmatpush1.bf16.msra.mxu0 0
  %689 = vmatprep.subr.bf16.mxu0 0
  %690 = vmatpush1.bf16.msra.mxu0 0
  %691 = vmatprep.subr.bf16.mxu0 0
  %692 = vmatpush1.bf16.msra.mxu0 0
  %693 = vmatprep.subr.bf16.mxu0 0
  %694 = vmatpush1.bf16.msra.mxu0 0
  %695 = vmatprep.subr.bf16.mxu0 0
  %696 = vmatpush1.bf16.msra.mxu0 0
  %697 = vmatprep.subr.bf16.mxu0 0
  %698 = vmatpush1.bf16.msra.mxu0 0
  %699 = vmatprep.mubr.bf16.mxu0 0
  %700 = vmatmul.mubr.bf16.gmra.mrb[0].mxu0 %v625
  %v701 = vpop.f32.mrb[0].mxu0
  %v702 = vadd.f32 0.0, %v701
  %v703 = vpop.f32.mrb[0].mxu0
  %v704 = vpop.f32.mrb[0].mxu0
  %v705 = vpop.f32.mrb[0].mxu0
  %706 = vdwg.mxu0
  %v707 = vadd.f32 %v160, %v661
  %v708 = vxor.u32 %v707, 2147483648
  %v709 = vmul.f32 %v708, 1.442695
  %v710 = vpow.pop %v709
  %v711 = vadd.f32 %v710, 1.0
  %v712 = vrcp.pop %v711
  %v713 = vmul.f32 1.0, %v712
  %v714 = vadd.f32 %v162, %v663
  %v715 = vxor.u32 %v714, 2147483648
  %v716 = vmul.f32 %v715, 1.442695
  %v717 = vpow.pop %v716
  %v718 = vadd.f32 %v717, 1.0
  %v719 = vrcp.pop %v718
  %v720 = vmul.f32 1.0, %v719
  %v721 = vadd.f32 %v702, %v258
  %v722 = vmul.f32 %v713, %v721
  %v723 = vadd.f32 %v231, %v722
  %v724 = vtanh.pop %v723
  %v725 = vsub.f32 %v624, %v724
  %v726 = vmul.f32 %v720, %v725
  %v727 = vadd.f32 %v724, %v726
  %v728 = vpack.c.bf16 %v727, %v727
  %729 = vmatprep.subr.bf16.mxu0 %v373
  %730 = vmatpush1.bf16.msra.mxu0 %v372
  %731 = vmatprep.subr.bf16.mxu0 %v376
  %732 = vmatpush1.bf16.msra.mxu0 %v375
  %733 = vmatprep.subr.bf16.mxu0 %v379
  %734 = vmatpush1.bf16.msra.mxu0 %v378
  %735 = vmatprep.subr.bf16.mxu0 %v382
  %736 = vmatpush1.bf16.msra.mxu0 %v381
  %737 = vmatprep.subr.bf16.mxu0 %v385
  %738 = vmatpush1.bf16.msra.mxu0 %v384
  %739 = vmatprep.subr.bf16.mxu0 %v388
  %740 = vmatpush1.bf16.msra.mxu0 %v387
  %741 = vmatprep.subr.bf16.mxu0 %v391
  %742 = vmatpush1.bf16.msra.mxu0 %v390
  %743 = vmatprep.subr.bf16.mxu0 %v394
  %744 = vmatpush1.bf16.msra.mxu0 %v393
  %745 = vmatprep.subr.bf16.mxu0 0
  %746 = vmatpush1.bf16.msra.mxu0 0
  %747 = vmatprep.subr.bf16.mxu0 0
  %748 = vmatpush1.bf16.msra.mxu0 0
  %749 = vmatprep.subr.bf16.mxu0 0
  %750 = vmatpush1.bf16.msra.mxu0 0
  %751 = vmatprep.subr.bf16.mxu0 0
  %752 = vmatpush1.bf16.msra.mxu0 0
  %753 = vmatprep.subr.bf16.mxu0 0
  %754 = vmatpush1.bf16.msra.mxu0 0
  %755 = vmatprep.subr.bf16.mxu0 0
  %756 = vmatpush1.bf16.msra.mxu0 0
  %757 = vmatprep.subr.bf16.mxu0 0
  %758 = vmatpush1.bf16.msra.mxu0 0
  %759 = vmatprep.subr.bf16.mxu0 0
  %760 = vmatpush1.bf16.msra.mxu0 0
  %761 = vmatprep.mubr.bf16.mxu0 0
  %762 = vmatmul.mubr.bf16.gmra.mrb[0].mxu0 %v728
  %v763 = vpop.f32.mrb[0].mxu0
  %v764 = vadd.f32 0.0, %v763
  %v765 = vpop.f32.mrb[0].mxu0
  %v766 = vadd.f32 0.0, %v765
  %v767 = vpop.f32.mrb[0].mxu0
  %v768 = vpop.f32.mrb[0].mxu0
  %769 = vdwg.mxu0
  %770 = vmatprep.subr.bf16.mxu0 0
  %771 = vmatpush1.bf16.msra.mxu0 %v374
  %772 = vmatprep.subr.bf16.mxu0 0
  %773 = vmatpush1.bf16.msra.mxu0 %v377
  %774 = vmatprep.subr.bf16.mxu0 0
  %775 = vmatpush1.bf16.msra.mxu0 %v380
  %776 = vmatprep.subr.bf16.mxu0 0
  %777 = vmatpush1.bf16.msra.mxu0 %v383
  %778 = vmatprep.subr.bf16.mxu0 0
  %779 = vmatpush1.bf16.msra.mxu0 %v386
  %780 = vmatprep.subr.bf16.mxu0 0
  %781 = vmatpush1.bf16.msra.mxu0 %v389
  %782 = vmatprep.subr.bf16.mxu0 0
  %783 = vmatpush1.bf16.msra.mxu0 %v392
  %784 = vmatprep.subr.bf16.mxu0 0
  %785 = vmatpush1.bf16.msra.mxu0 %v395
  %786 = vmatprep.subr.bf16.mxu0 0
  %787 = vmatpush1.bf16.msra.mxu0 0
  %788 = vmatprep.subr.bf16.mxu0 0
  %789 = vmatpush1.bf16.msra.mxu0 0
  %790 = vmatprep.subr.bf16.mxu0 0
  %791 = vmatpush1.bf16.msra.mxu0 0
  %792 = vmatprep.subr.bf16.mxu0 0
  %793 = vmatpush1.bf16.msra.mxu0 0
  %794 = vmatprep.subr.bf16.mxu0 0
  %795 = vmatpush1.bf16.msra.mxu0 0
  %796 = vmatprep.subr.bf16.mxu0 0
  %797 = vmatpush1.bf16.msra.mxu0 0
  %798 = vmatprep.subr.bf16.mxu0 0
  %799 = vmatpush1.bf16.msra.mxu0 0
  %800 = vmatprep.subr.bf16.mxu0 0
  %801 = vmatpush1.bf16.msra.mxu0 0
  %802 = vmatprep.mubr.bf16.mxu0 0
  %803 = vmatmul.mubr.bf16.gmra.mrb[0].mxu0 %v728
  %v804 = vpop.f32.mrb[0].mxu0
  %v805 = vadd.f32 0.0, %v804
  %v806 = vpop.f32.mrb[0].mxu0
  %v807 = vpop.f32.mrb[0].mxu0
  %v808 = vpop.f32.mrb[0].mxu0
  %809 = vdwg.mxu0
  %v810 = vadd.f32 %v164, %v764
  %v811 = vxor.u32 %v810, 2147483648
  %v812 = vmul.f32 %v811, 1.442695
  %v813 = vpow.pop %v812
  %v814 = vadd.f32 %v813, 1.0
  %v815 = vrcp.pop %v814
  %v816 = vmul.f32 1.0, %v815
  %v817 = vadd.f32 %v166, %v766
  %v818 = vxor.u32 %v817, 2147483648
  %v819 = vmul.f32 %v818, 1.442695
  %v820 = vpow.pop %v819
  %v821 = vadd.f32 %v820, 1.0
  %v822 = vrcp.pop %v821
  %v823 = vmul.f32 1.0, %v822
  %v824 = vadd.f32 %v805, %v258
  %v825 = vmul.f32 %v816, %v824
  %v826 = vadd.f32 %v234, %v825
  %v827 = vtanh.pop %v826
  %v828 = vsub.f32 %v727, %v827
  %v829 = vmul.f32 %v823, %v828
  %v830 = vadd.f32 %v827, %v829
  %v831 = vpack.c.bf16 %v830, %v830
  %832 = vmatprep.subr.bf16.mxu0 %v373
  %833 = vmatpush1.bf16.msra.mxu0 %v372
  %834 = vmatprep.subr.bf16.mxu0 %v376
  %835 = vmatpush1.bf16.msra.mxu0 %v375
  %836 = vmatprep.subr.bf16.mxu0 %v379
  %837 = vmatpush1.bf16.msra.mxu0 %v378
  %838 = vmatprep.subr.bf16.mxu0 %v382
  %839 = vmatpush1.bf16.msra.mxu0 %v381
  %840 = vmatprep.subr.bf16.mxu0 %v385
  %841 = vmatpush1.bf16.msra.mxu0 %v384
  %842 = vmatprep.subr.bf16.mxu0 %v388
  %843 = vmatpush1.bf16.msra.mxu0 %v387
  %844 = vmatprep.subr.bf16.mxu0 %v391
  %845 = vmatpush1.bf16.msra.mxu0 %v390
  %846 = vmatprep.subr.bf16.mxu0 %v394
  %847 = vmatpush1.bf16.msra.mxu0 %v393
  %848 = vmatprep.subr.bf16.mxu0 0
  %849 = vmatpush1.bf16.msra.mxu0 0
  %850 = vmatprep.subr.bf16.mxu0 0
  %851 = vmatpush1.bf16.msra.mxu0 0
  %852 = vmatprep.subr.bf16.mxu0 0
  %853 = vmatpush1.bf16.msra.mxu0 0
  %854 = vmatprep.subr.bf16.mxu0 0
  %855 = vmatpush1.bf16.msra.mxu0 0
  %856 = vmatprep.subr.bf16.mxu0 0
  %857 = vmatpush1.bf16.msra.mxu0 0
  %858 = vmatprep.subr.bf16.mxu0 0
  %859 = vmatpush1.bf16.msra.mxu0 0
  %860 = vmatprep.subr.bf16.mxu0 0
  %861 = vmatpush1.bf16.msra.mxu0 0
  %862 = vmatprep.subr.bf16.mxu0 0
  %863 = vmatpush1.bf16.msra.mxu0 0
  %864 = vmatprep.mubr.bf16.mxu0 0
  %865 = vmatmul.mubr.bf16.gmra.mrb[0].mxu0 %v831
  %v866 = vpop.f32.mrb[0].mxu0
  %v867 = vadd.f32 0.0, %v866
  %v868 = vpop.f32.mrb[0].mxu0
  %v869 = vadd.f32 0.0, %v868
  %v870 = vpop.f32.mrb[0].mxu0
  %v871 = vpop.f32.mrb[0].mxu0
  %872 = vdwg.mxu0
  %873 = vmatprep.subr.bf16.mxu0 0
  %874 = vmatpush1.bf16.msra.mxu0 %v374
  %875 = vmatprep.subr.bf16.mxu0 0
  %876 = vmatpush1.bf16.msra.mxu0 %v377
  %877 = vmatprep.subr.bf16.mxu0 0
  %878 = vmatpush1.bf16.msra.mxu0 %v380
  %879 = vmatprep.subr.bf16.mxu0 0
  %880 = vmatpush1.bf16.msra.mxu0 %v383
  %881 = vmatprep.subr.bf16.mxu0 0
  %882 = vmatpush1.bf16.msra.mxu0 %v386
  %883 = vmatprep.subr.bf16.mxu0 0
  %884 = vmatpush1.bf16.msra.mxu0 %v389
  %885 = vmatprep.subr.bf16.mxu0 0
  %886 = vmatpush1.bf16.msra.mxu0 %v392
  %887 = vmatprep.subr.bf16.mxu0 0
  %888 = vmatpush1.bf16.msra.mxu0 %v395
  %889 = vmatprep.subr.bf16.mxu0 0
  %890 = vmatpush1.bf16.msra.mxu0 0
  %891 = vmatprep.subr.bf16.mxu0 0
  %892 = vmatpush1.bf16.msra.mxu0 0
  %893 = vmatprep.subr.bf16.mxu0 0
  %894 = vmatpush1.bf16.msra.mxu0 0
  %895 = vmatprep.subr.bf16.mxu0 0
  %896 = vmatpush1.bf16.msra.mxu0 0
  %897 = vmatprep.subr.bf16.mxu0 0
  %898 = vmatpush1.bf16.msra.mxu0 0
  %899 = vmatprep.subr.bf16.mxu0 0
  %900 = vmatpush1.bf16.msra.mxu0 0
  %901 = vmatprep.subr.bf16.mxu0 0
  %902 = vmatpush1.bf16.msra.mxu0 0
  %903 = vmatprep.subr.bf16.mxu0 0
  %904 = vmatpush1.bf16.msra.mxu0 0
  %905 = vmatprep.mubr.bf16.mxu0 0
  %906 = vmatmul.mubr.bf16.gmra.mrb[0].mxu0 %v831
  %v907 = vpop.f32.mrb[0].mxu0
  %v908 = vadd.f32 0.0, %v907
  %v909 = vpop.f32.mrb[0].mxu0
  %v910 = vpop.f32.mrb[0].mxu0
  %v911 = vpop.f32.mrb[0].mxu0
  %912 = vdwg.mxu0
  %v913 = vadd.f32 %v170, %v867
  %v914 = vxor.u32 %v913, 2147483648
  %v915 = vmul.f32 %v914, 1.442695
  %v916 = vpow.pop %v915
  %v917 = vadd.f32 %v916, 1.0
  %v918 = vrcp.pop %v917
  %v919 = vmul.f32 1.0, %v918
  %v920 = vadd.f32 %v172, %v869
  %v921 = vxor.u32 %v920, 2147483648
  %v922 = vmul.f32 %v921, 1.442695
  %v923 = vpow.pop %v922
  %v924 = vadd.f32 %v923, 1.0
  %v925 = vrcp.pop %v924
  %v926 = vmul.f32 1.0, %v925
  %v927 = vadd.f32 %v908, %v258
  %v928 = vmul.f32 %v919, %v927
  %v929 = vadd.f32 %v239, %v928
  %v930 = vtanh.pop %v929
  %v931 = vsub.f32 %v830, %v930
  %v932 = vmul.f32 %v926, %v931
  %v933 = vadd.f32 %v930, %v932
  %v934 = vpack.c.bf16 %v933, %v933
  %935 = vmatprep.subr.bf16.mxu0 %v373
  %936 = vmatpush1.bf16.msra.mxu0 %v372
  %937 = vmatprep.subr.bf16.mxu0 %v376
  %938 = vmatpush1.bf16.msra.mxu0 %v375
  %939 = vmatprep.subr.bf16.mxu0 %v379
  %940 = vmatpush1.bf16.msra.mxu0 %v378
  %941 = vmatprep.subr.bf16.mxu0 %v382
  %942 = vmatpush1.bf16.msra.mxu0 %v381
  %943 = vmatprep.subr.bf16.mxu0 %v385
  %944 = vmatpush1.bf16.msra.mxu0 %v384
  %945 = vmatprep.subr.bf16.mxu0 %v388
  %946 = vmatpush1.bf16.msra.mxu0 %v387
  %947 = vmatprep.subr.bf16.mxu0 %v391
  %948 = vmatpush1.bf16.msra.mxu0 %v390
  %949 = vmatprep.subr.bf16.mxu0 %v394
  %950 = vmatpush1.bf16.msra.mxu0 %v393
  %951 = vmatprep.subr.bf16.mxu0 0
  %952 = vmatpush1.bf16.msra.mxu0 0
  %953 = vmatprep.subr.bf16.mxu0 0
  %954 = vmatpush1.bf16.msra.mxu0 0
  %955 = vmatprep.subr.bf16.mxu0 0
  %956 = vmatpush1.bf16.msra.mxu0 0
  %957 = vmatprep.subr.bf16.mxu0 0
  %958 = vmatpush1.bf16.msra.mxu0 0
  %959 = vmatprep.subr.bf16.mxu0 0
  %960 = vmatpush1.bf16.msra.mxu0 0
  %961 = vmatprep.subr.bf16.mxu0 0
  %962 = vmatpush1.bf16.msra.mxu0 0
  %963 = vmatprep.subr.bf16.mxu0 0
  %964 = vmatpush1.bf16.msra.mxu0 0
  %965 = vmatprep.subr.bf16.mxu0 0
  %966 = vmatpush1.bf16.msra.mxu0 0
  %967 = vmatprep.mubr.bf16.mxu0 0
  %968 = vmatmul.mubr.bf16.gmra.mrb[0].mxu0 %v934
  %v969 = vpop.f32.mrb[0].mxu0
  %v970 = vadd.f32 0.0, %v969
  %v971 = vpop.f32.mrb[0].mxu0
  %v972 = vadd.f32 0.0, %v971
  %v973 = vpop.f32.mrb[0].mxu0
  %v974 = vpop.f32.mrb[0].mxu0
  %975 = vdwg.mxu0
  %976 = vmatprep.subr.bf16.mxu0 0
  %977 = vmatpush1.bf16.msra.mxu0 %v374
  %978 = vmatprep.subr.bf16.mxu0 0
  %979 = vmatpush1.bf16.msra.mxu0 %v377
  %980 = vmatprep.subr.bf16.mxu0 0
  %981 = vmatpush1.bf16.msra.mxu0 %v380
  %982 = vmatprep.subr.bf16.mxu0 0
  %983 = vmatpush1.bf16.msra.mxu0 %v383
  %984 = vmatprep.subr.bf16.mxu0 0
  %985 = vmatpush1.bf16.msra.mxu0 %v386
  %986 = vmatprep.subr.bf16.mxu0 0
  %987 = vmatpush1.bf16.msra.mxu0 %v389
  %988 = vmatprep.subr.bf16.mxu0 0
  %989 = vmatpush1.bf16.msra.mxu0 %v392
  %990 = vmatprep.subr.bf16.mxu0 0
  %991 = vmatpush1.bf16.msra.mxu0 %v395
  %992 = vmatprep.subr.bf16.mxu0 0
  %993 = vmatpush1.bf16.msra.mxu0 0
  %994 = vmatprep.subr.bf16.mxu0 0
  %995 = vmatpush1.bf16.msra.mxu0 0
  %996 = vmatprep.subr.bf16.mxu0 0
  %997 = vmatpush1.bf16.msra.mxu0 0
  %998 = vmatprep.subr.bf16.mxu0 0
  %999 = vmatpush1.bf16.msra.mxu0 0
  %1000 = vmatprep.subr.bf16.mxu0 0
  %1001 = vmatpush1.bf16.msra.mxu0 0
  %1002 = vmatprep.subr.bf16.mxu0 0
  %1003 = vmatpush1.bf16.msra.mxu0 0
  %1004 = vmatprep.subr.bf16.mxu0 0
  %1005 = vmatpush1.bf16.msra.mxu0 0
  %1006 = vmatprep.subr.bf16.mxu0 0
  %1007 = vmatpush1.bf16.msra.mxu0 0
  %1008 = vmatprep.mubr.bf16.mxu0 0
  %1009 = vmatmul.mubr.bf16.gmra.mrb[0].mxu0 %v934
  %v1010 = vpop.f32.mrb[0].mxu0
  %v1011 = vadd.f32 0.0, %v1010
  %v1012 = vpop.f32.mrb[0].mxu0
  %v1013 = vpop.f32.mrb[0].mxu0
  %v1014 = vpop.f32.mrb[0].mxu0
  %1015 = vdwg.mxu0
  %v1016 = vadd.f32 %v174, %v970
  %v1017 = vxor.u32 %v1016, 2147483648
  %v1018 = vmul.f32 %v1017, 1.442695
  %v1019 = vpow.pop %v1018
  %v1020 = vadd.f32 %v1019, 1.0
  %v1021 = vrcp.pop %v1020
  %v1022 = vmul.f32 1.0, %v1021
  %v1023 = vadd.f32 %v176, %v972
  %v1024 = vxor.u32 %v1023, 2147483648
  %v1025 = vmul.f32 %v1024, 1.442695
  %v1026 = vpow.pop %v1025
  %v1027 = vadd.f32 %v1026, 1.0
  %v1028 = vrcp.pop %v1027
  %v1029 = vmul.f32 1.0, %v1028
  %v1030 = vadd.f32 %v1011, %v258
  %v1031 = vmul.f32 %v1022, %v1030
  %v1032 = vadd.f32 %v242, %v1031
  %v1033 = vtanh.pop %v1032
  %v1034 = vsub.f32 %v933, %v1033
  %v1035 = vmul.f32 %v1029, %v1034
  %v1036 = vadd.f32 %v1033, %v1035
  %v1037 = vpack.c.bf16 %v1036, %v1036
  %1038 = vmatprep.subr.bf16.mxu0 %v373
  %1039 = vmatpush1.bf16.msra.mxu0 %v372
  %1040 = vmatprep.subr.bf16.mxu0 %v376
  %1041 = vmatpush1.bf16.msra.mxu0 %v375
  %1042 = vmatprep.subr.bf16.mxu0 %v379
  %1043 = vmatpush1.bf16.msra.mxu0 %v378
  %1044 = vmatprep.subr.bf16.mxu0 %v382
  %1045 = vmatpush1.bf16.msra.mxu0 %v381
  %1046 = vmatprep.subr.bf16.mxu0 %v385
  %1047 = vmatpush1.bf16.msra.mxu0 %v384
  %1048 = vmatprep.subr.bf16.mxu0 %v388
  %1049 = vmatpush1.bf16.msra.mxu0 %v387
  %1050 = vmatprep.subr.bf16.mxu0 %v391
  %1051 = vmatpush1.bf16.msra.mxu0 %v390
  %1052 = vmatprep.subr.bf16.mxu0 %v394
  %1053 = vmatpush1.bf16.msra.mxu0 %v393
  %1054 = vmatprep.subr.bf16.mxu0 0
  %1055 = vmatpush1.bf16.msra.mxu0 0
  %1056 = vmatprep.subr.bf16.mxu0 0
  %1057 = vmatpush1.bf16.msra.mxu0 0
  %1058 = vmatprep.subr.bf16.mxu0 0
  %1059 = vmatpush1.bf16.msra.mxu0 0
  %1060 = vmatprep.subr.bf16.mxu0 0
  %1061 = vmatpush1.bf16.msra.mxu0 0
  %1062 = vmatprep.subr.bf16.mxu0 0
  %1063 = vmatpush1.bf16.msra.mxu0 0
  %1064 = vmatprep.subr.bf16.mxu0 0
  %1065 = vmatpush1.bf16.msra.mxu0 0
  %1066 = vmatprep.subr.bf16.mxu0 0
  %1067 = vmatpush1.bf16.msra.mxu0 0
  %1068 = vmatprep.subr.bf16.mxu0 0
  %1069 = vmatpush1.bf16.msra.mxu0 0
  %1070 = vmatprep.mubr.bf16.mxu0 0
  %1071 = vmatmul.mubr.bf16.gmra.mrb[0].mxu0 %v1037
  %v1072 = vpop.f32.mrb[0].mxu0
  %v1073 = vadd.f32 0.0, %v1072
  %v1074 = vpop.f32.mrb[0].mxu0
  %v1075 = vadd.f32 0.0, %v1074
  %v1076 = vpop.f32.mrb[0].mxu0
  %v1077 = vpop.f32.mrb[0].mxu0
  %1078 = vdwg.mxu0
  %1079 = vmatprep.subr.bf16.mxu0 0
  %1080 = vmatpush1.bf16.msra.mxu0 %v374
  %1081 = vmatprep.subr.bf16.mxu0 0
  %1082 = vmatpush1.bf16.msra.mxu0 %v377
  %1083 = vmatprep.subr.bf16.mxu0 0
  %1084 = vmatpush1.bf16.msra.mxu0 %v380
  %1085 = vmatprep.subr.bf16.mxu0 0
  %1086 = vmatpush1.bf16.msra.mxu0 %v383
  %1087 = vmatprep.subr.bf16.mxu0 0
  %1088 = vmatpush1.bf16.msra.mxu0 %v386
  %1089 = vmatprep.subr.bf16.mxu0 0
  %1090 = vmatpush1.bf16.msra.mxu0 %v389
  %1091 = vmatprep.subr.bf16.mxu0 0
  %1092 = vmatpush1.bf16.msra.mxu0 %v392
  %1093 = vmatprep.subr.bf16.mxu0 0
  %1094 = vmatpush1.bf16.msra.mxu0 %v395
  %1095 = vmatprep.subr.bf16.mxu0 0
  %1096 = vmatpush1.bf16.msra.mxu0 0
  %1097 = vmatprep.subr.bf16.mxu0 0
  %1098 = vmatpush1.bf16.msra.mxu0 0
  %1099 = vmatprep.subr.bf16.mxu0 0
  %1100 = vmatpush1.bf16.msra.mxu0 0
  %1101 = vmatprep.subr.bf16.mxu0 0
  %1102 = vmatpush1.bf16.msra.mxu0 0
  %1103 = vmatprep.subr.bf16.mxu0 0
  %1104 = vmatpush1.bf16.msra.mxu0 0
  %1105 = vmatprep.subr.bf16.mxu0 0
  %1106 = vmatpush1.bf16.msra.mxu0 0
  %1107 = vmatprep.subr.bf16.mxu0 0
  %1108 = vmatpush1.bf16.msra.mxu0 0
  %1109 = vmatprep.subr.bf16.mxu0 0
  %1110 = vmatpush1.bf16.msra.mxu0 0
  %1111 = vmatprep.mubr.bf16.mxu0 0
  %1112 = vmatmul.mubr.bf16.gmra.mrb[0].mxu0 %v1037
  %v1113 = vpop.f32.mrb[0].mxu0
  %v1114 = vadd.f32 0.0, %v1113
  %v1115 = vpop.f32.mrb[0].mxu0
  %v1116 = vpop.f32.mrb[0].mxu0
  %v1117 = vpop.f32.mrb[0].mxu0
  %1118 = vdwg.mxu0
  %v1119 = vadd.f32 %v180, %v1073
  %v1120 = vxor.u32 %v1119, 2147483648
  %v1121 = vmul.f32 %v1120, 1.442695
  %v1122 = vpow.pop %v1121
  %v1123 = vadd.f32 %v1122, 1.0
  %v1124 = vrcp.pop %v1123
  %v1125 = vmul.f32 1.0, %v1124
  %v1126 = vadd.f32 %v182, %v1075
  %v1127 = vxor.u32 %v1126, 2147483648
  %v1128 = vmul.f32 %v1127, 1.442695
  %v1129 = vpow.pop %v1128
  %v1130 = vadd.f32 %v1129, 1.0
  %v1131 = vrcp.pop %v1130
  %v1132 = vmul.f32 1.0, %v1131
  %v1133 = vadd.f32 %v1114, %v258
  %v1134 = vmul.f32 %v1125, %v1133
  %v1135 = vadd.f32 %v247, %v1134
  %v1136 = vtanh.pop %v1135
  %v1137 = vsub.f32 %v1036, %v1136
  %v1138 = vmul.f32 %v1132, %v1137
  %v1139 = vadd.f32 %v1136, %v1138
  %v1140 = vpack.c.bf16 %v1139, %v1139
  %1141 = vmatprep.subr.bf16.mxu0 %v373
  %1142 = vmatpush1.bf16.msra.mxu0 %v372
  %1143 = vmatprep.subr.bf16.mxu0 %v376
  %1144 = vmatpush1.bf16.msra.mxu0 %v375
  %1145 = vmatprep.subr.bf16.mxu0 %v379
  %1146 = vmatpush1.bf16.msra.mxu0 %v378
  %1147 = vmatprep.subr.bf16.mxu0 %v382
  %1148 = vmatpush1.bf16.msra.mxu0 %v381
  %1149 = vmatprep.subr.bf16.mxu0 %v385
  %1150 = vmatpush1.bf16.msra.mxu0 %v384
  %1151 = vmatprep.subr.bf16.mxu0 %v388
  %1152 = vmatpush1.bf16.msra.mxu0 %v387
  %1153 = vmatprep.subr.bf16.mxu0 %v391
  %1154 = vmatpush1.bf16.msra.mxu0 %v390
  %1155 = vmatprep.subr.bf16.mxu0 %v394
  %1156 = vmatpush1.bf16.msra.mxu0 %v393
  %1157 = vmatprep.subr.bf16.mxu0 0
  %1158 = vmatpush1.bf16.msra.mxu0 0
  %1159 = vmatprep.subr.bf16.mxu0 0
  %1160 = vmatpush1.bf16.msra.mxu0 0
  %1161 = vmatprep.subr.bf16.mxu0 0
  %1162 = vmatpush1.bf16.msra.mxu0 0
  %1163 = vmatprep.subr.bf16.mxu0 0
  %1164 = vmatpush1.bf16.msra.mxu0 0
  %1165 = vmatprep.subr.bf16.mxu0 0
  %1166 = vmatpush1.bf16.msra.mxu0 0
  %1167 = vmatprep.subr.bf16.mxu0 0
  %1168 = vmatpush1.bf16.msra.mxu0 0
  %1169 = vmatprep.subr.bf16.mxu0 0
  %1170 = vmatpush1.bf16.msra.mxu0 0
  %1171 = vmatprep.subr.bf16.mxu0 0
  %1172 = vmatpush1.bf16.msra.mxu0 0
  %1173 = vmatprep.mubr.bf16.mxu0 0
  %1174 = vmatmul.mubr.bf16.gmra.mrb[0].mxu0 %v1140
  %v1175 = vpop.f32.mrb[0].mxu0
  %v1176 = vadd.f32 0.0, %v1175
  %v1177 = vpop.f32.mrb[0].mxu0
  %v1178 = vadd.f32 0.0, %v1177
  %v1179 = vpop.f32.mrb[0].mxu0
  %v1180 = vpop.f32.mrb[0].mxu0
  %1181 = vdwg.mxu0
  %1182 = vmatprep.subr.bf16.mxu0 0
  %1183 = vmatpush1.bf16.msra.mxu0 %v374
  %1184 = vmatprep.subr.bf16.mxu0 0
  %1185 = vmatpush1.bf16.msra.mxu0 %v377
  %1186 = vmatprep.subr.bf16.mxu0 0
  %1187 = vmatpush1.bf16.msra.mxu0 %v380
  %1188 = vmatprep.subr.bf16.mxu0 0
  %1189 = vmatpush1.bf16.msra.mxu0 %v383
  %1190 = vmatprep.subr.bf16.mxu0 0
  %1191 = vmatpush1.bf16.msra.mxu0 %v386
  %1192 = vmatprep.subr.bf16.mxu0 0
  %1193 = vmatpush1.bf16.msra.mxu0 %v389
  %1194 = vmatprep.subr.bf16.mxu0 0
  %1195 = vmatpush1.bf16.msra.mxu0 %v392
  %1196 = vmatprep.subr.bf16.mxu0 0
  %1197 = vmatpush1.bf16.msra.mxu0 %v395
  %1198 = vmatprep.subr.bf16.mxu0 0
  %1199 = vmatpush1.bf16.msra.mxu0 0
  %1200 = vmatprep.subr.bf16.mxu0 0
  %1201 = vmatpush1.bf16.msra.mxu0 0
  %1202 = vmatprep.subr.bf16.mxu0 0
  %1203 = vmatpush1.bf16.msra.mxu0 0
  %1204 = vmatprep.subr.bf16.mxu0 0
  %1205 = vmatpush1.bf16.msra.mxu0 0
  %1206 = vmatprep.subr.bf16.mxu0 0
  %1207 = vmatpush1.bf16.msra.mxu0 0
  %1208 = vmatprep.subr.bf16.mxu0 0
  %1209 = vmatpush1.bf16.msra.mxu0 0
  %1210 = vmatprep.subr.bf16.mxu0 0
  %1211 = vmatpush1.bf16.msra.mxu0 0
  %1212 = vmatprep.subr.bf16.mxu0 0
  %1213 = vmatpush1.bf16.msra.mxu0 0
  %1214 = vmatprep.mubr.bf16.mxu0 0
  %1215 = vmatmul.mubr.bf16.gmra.mrb[0].mxu0 %v1140
  %v1216 = vpop.f32.mrb[0].mxu0
  %v1217 = vadd.f32 0.0, %v1216
  %v1218 = vpop.f32.mrb[0].mxu0
  %v1219 = vpop.f32.mrb[0].mxu0
  %v1220 = vpop.f32.mrb[0].mxu0
  %1221 = vdwg.mxu0
  %v1222 = vadd.f32 %v184, %v1176
  %v1223 = vxor.u32 %v1222, 2147483648
  %v1224 = vmul.f32 %v1223, 1.442695
  %v1225 = vpow.pop %v1224
  %v1226 = vadd.f32 %v1225, 1.0
  %v1227 = vrcp.pop %v1226
  %v1228 = vmul.f32 1.0, %v1227
  %v1229 = vadd.f32 %v186, %v1178
  %v1230 = vxor.u32 %v1229, 2147483648
  %v1231 = vmul.f32 %v1230, 1.442695
  %v1232 = vpow.pop %v1231
  %v1233 = vadd.f32 %v1232, 1.0
  %v1234 = vrcp.pop %v1233
  %v1235 = vmul.f32 1.0, %v1234
  %v1236 = vadd.f32 %v1217, %v258
  %v1237 = vmul.f32 %v1228, %v1236
  %v1238 = vadd.f32 %v250, %v1237
  %v1239 = vtanh.pop %v1238
  %v1240 = vsub.f32 %v1139, %v1239
  %v1241 = vmul.f32 %v1235, %v1240
  %v1242 = vadd.f32 %v1239, %v1241
  %1243 = vst [vmem:[%s8] sm:$0xff] %v521
  %1244 = vst [vmem:[%s8 + $0x8] sm:$0xff] %v624
  %1245 = vst [vmem:[%s8 + $0x10] sm:$0xff] %v727
  %1246 = vst [vmem:[%s8 + $0x18] sm:$0xff] %v830
  %1247 = vst [vmem:[%s8 + $0x20] sm:$0xff] %v933
  %1248 = vst [vmem:[%s8 + $0x28] sm:$0xff] %v1036
  %1249 = vst [vmem:[%s8 + $0x30] sm:$0xff] %v1139
  %1250 = vst [vmem:[%s8 + $0x38] sm:$0xff] %v1242
  %v1251 = vpack.c.bf16 %v624, %v521
  %v1252 = vpack.c.bf16 %v830, %v727
  %v1253 = vpack.c.bf16 %v1036, %v933
  %v1254 = vpack.c.bf16 %v1242, %v1139
  %v1255 = vld [vmem:[%s5] sm:$0xf]
  %v1256 = vld [vmem:[%s5 + $0x4] sm:$0xf]
  %v1257 = vld [vmem:[%s5 + $0x8] sm:$0xf]
  %v1258 = vld [vmem:[%s5 + $0xc] sm:$0xf]
  %v1259 = vld [vmem:[%s5 + $0x10] sm:$0xf]
  %v1260 = vld [vmem:[%s5 + $0x14] sm:$0xf]
  %v1261 = vld [vmem:[%s5 + $0x18] sm:$0xf]
  %v1262 = vld [vmem:[%s5 + $0x1c] sm:$0xf]
  %v1263 = vld [vmem:[%s5 + $0x20] sm:$0xf]
  %v1264 = vld [vmem:[%s5 + $0x24] sm:$0xf]
  %v1265 = vld [vmem:[%s5 + $0x28] sm:$0xf]
  %v1266 = vld [vmem:[%s5 + $0x2c] sm:$0xf]
  %v1267 = vld [vmem:[%s5 + $0x30] sm:$0xf]
  %v1268 = vld [vmem:[%s5 + $0x34] sm:$0xf]
  %v1269 = vld [vmem:[%s5 + $0x38] sm:$0xf]
  %v1270 = vld [vmem:[%s5 + $0x3c] sm:$0xf]
  %v1271 = vld [vmem:[%s6] sm:$0x1]
  %v1273 = vlaneseq
  %v1274 = vshrl.u32 %v1273, 7
  %v1275 = vsub.s32 0, %v1274
  %v1276 = vrot.slane %v1271, %v1275
  %v1294 = vunpack.c.l.b16 %v1255
  %v1295 = vunpack.c.l.b16 %v1256
  %v1296 = vunpack.c.l.b16 %v1257
  %v1297 = vunpack.c.l.b16 %v1258
  %v1298 = vunpack.c.l.b16 %v1259
  %v1299 = vunpack.c.l.b16 %v1260
  %v1300 = vunpack.c.l.b16 %v1261
  %v1301 = vunpack.c.l.b16 %v1262
  %v1302 = vunpack.c.l.b16 %v1263
  %v1303 = vunpack.c.l.b16 %v1264
  %v1304 = vunpack.c.l.b16 %v1265
  %v1305 = vunpack.c.l.b16 %v1266
  %v1306 = vunpack.c.l.b16 %v1267
  %v1307 = vunpack.c.l.b16 %v1268
  %v1308 = vunpack.c.l.b16 %v1269
  %v1309 = vunpack.c.l.b16 %v1270
  %v1310 = vpack.c.b16 %v1295, %v1294
  %v1311 = vpack.c.b16 %v1297, %v1296
  %v1312 = vpack.c.b16 %v1299, %v1298
  %v1313 = vpack.c.b16 %v1301, %v1300
  %v1314 = vpack.c.b16 %v1303, %v1302
  %v1315 = vpack.c.b16 %v1305, %v1304
  %v1316 = vpack.c.b16 %v1307, %v1306
  %v1317 = vpack.c.b16 %v1309, %v1308
  %1326 = vmatprep.subr.bf16.mxu0 0
  %1327 = vmatpush1.bf16.msra.mxu0 %v1310
  %1328 = vmatprep.subr.bf16.mxu0 0
  %1329 = vmatpush1.bf16.msra.mxu0 %v1311
  %1330 = vmatprep.subr.bf16.mxu0 0
  %1331 = vmatpush1.bf16.msra.mxu0 %v1312
  %1332 = vmatprep.subr.bf16.mxu0 0
  %1333 = vmatpush1.bf16.msra.mxu0 %v1313
  %1334 = vmatprep.subr.bf16.mxu0 0
  %1335 = vmatpush1.bf16.msra.mxu0 %v1314
  %1336 = vmatprep.subr.bf16.mxu0 0
  %1337 = vmatpush1.bf16.msra.mxu0 %v1315
  %1338 = vmatprep.subr.bf16.mxu0 0
  %1339 = vmatpush1.bf16.msra.mxu0 %v1316
  %1340 = vmatprep.subr.bf16.mxu0 0
  %1341 = vmatpush1.bf16.msra.mxu0 %v1317
  %1342 = vmatprep.subr.bf16.mxu0 0
  %1343 = vmatpush1.bf16.msra.mxu0 0
  %1344 = vmatprep.subr.bf16.mxu0 0
  %1345 = vmatpush1.bf16.msra.mxu0 0
  %1346 = vmatprep.subr.bf16.mxu0 0
  %1347 = vmatpush1.bf16.msra.mxu0 0
  %1348 = vmatprep.subr.bf16.mxu0 0
  %1349 = vmatpush1.bf16.msra.mxu0 0
  %1350 = vmatprep.subr.bf16.mxu0 0
  %1351 = vmatpush1.bf16.msra.mxu0 0
  %1352 = vmatprep.subr.bf16.mxu0 0
  %1353 = vmatpush1.bf16.msra.mxu0 0
  %1354 = vmatprep.subr.bf16.mxu0 0
  %1355 = vmatpush1.bf16.msra.mxu0 0
  %1356 = vmatprep.subr.bf16.mxu0 0
  %1357 = vmatpush1.bf16.msra.mxu0 0
  %1358 = vmatprep.mubr.bf16.mxu0 0
  %1359 = vmatmul.mubr.bf16.gmra.mrb[0].mxu0 %v1251
  %v1360 = vpop.f32.mrb[0].mxu0
  %v1361 = vadd.f32 %v1276, %v1360
  %v1362 = vpop.f32.mrb[0].mxu0
  %v1363 = vpop.f32.mrb[0].mxu0
  %v1364 = vadd.f32 %v1276, %v1363
  %v1365 = vpop.f32.mrb[0].mxu0
  %1366 = vmatprep.mubr.bf16.mxu0 0
  %1367 = vmatmul.mubr.bf16.gmra.mrb[0].mxu0 %v1252
  %v1368 = vpop.f32.mrb[0].mxu0
  %v1369 = vadd.f32 %v1276, %v1368
  %v1370 = vpop.f32.mrb[0].mxu0
  %v1371 = vpop.f32.mrb[0].mxu0
  %v1372 = vadd.f32 %v1276, %v1371
  %v1373 = vpop.f32.mrb[0].mxu0
  %1374 = vmatprep.mubr.bf16.mxu0 0
  %1375 = vmatmul.mubr.bf16.gmra.mrb[0].mxu0 %v1253
  %v1376 = vpop.f32.mrb[0].mxu0
  %v1377 = vadd.f32 %v1276, %v1376
  %v1378 = vpop.f32.mrb[0].mxu0
  %v1379 = vpop.f32.mrb[0].mxu0
  %v1380 = vadd.f32 %v1276, %v1379
  %v1381 = vpop.f32.mrb[0].mxu0
  %1382 = vmatprep.mubr.bf16.mxu0 0
  %1383 = vmatmul.mubr.bf16.gmra.mrb[0].mxu0 %v1254
  %v1384 = vpop.f32.mrb[0].mxu0
  %v1385 = vadd.f32 %v1276, %v1384
  %v1386 = vpop.f32.mrb[0].mxu0
  %v1387 = vpop.f32.mrb[0].mxu0
  %v1388 = vadd.f32 %v1276, %v1387
  %v1389 = vpop.f32.mrb[0].mxu0
  %1390 = vdwg.mxu0
  %1391 = vst [vmem:[%s7] sm:$0xff] %v1361
  %1392 = vst [vmem:[%s7 + $0x8] sm:$0xff] %v1364
  %1393 = vst [vmem:[%s7 + $0x10] sm:$0xff] %v1369
  %1394 = vst [vmem:[%s7 + $0x18] sm:$0xff] %v1372
  %1395 = vst [vmem:[%s7 + $0x20] sm:$0xff] %v1377
  %1396 = vst [vmem:[%s7 + $0x28] sm:$0xff] %v1380
  %1397 = vst [vmem:[%s7 + $0x30] sm:$0xff] %v1385
  %1398 = vst [vmem:[%s7 + $0x38] sm:$0xff] %v1388
  // Predicated region
  $region30: #{working_memory_net_forward.1} parent=0 // pred_check
    _
  $region31: #{working_memory_net_forward.1} parent=0 // pred_check_branch
    %1400 = sbr.rel (0) target = $region33
  $region32: #{working_memory_net_forward.1} parent=0 // pred_region
    _
  $region33: #{working_memory_net_forward.1} parent=0 // pred_fallthru
    _
  // Predicated region
  $region34: #{working_memory_net_forward.1} parent=0 // pred_check
    _
  $region35: #{working_memory_net_forward.1} parent=0 // pred_check_branch
    %1402 = sbr.rel (0) target = $region37
  $region36: #{working_memory_net_forward.1} parent=0 // pred_region
    _
  $region37: #{working_memory_net_forward.1} parent=0 // pred_fallthru
    _
  // Predicated region
  $region38: #{working_memory_net_forward.1} parent=0 // pred_check
    _
  $region39: #{working_memory_net_forward.1} parent=0 // pred_check_branch
    %1404 = sbr.rel (0) target = $region41
  $region40: #{working_memory_net_forward.1} parent=0 // pred_region
    _
  $region41: #{working_memory_net_forward.1} parent=0 // pred_fallthru
    _
  // Predicated region
  $region42: #{working_memory_net_forward.1} parent=0 // pred_check
    _
  $region43: #{working_memory_net_forward.1} parent=0 // pred_check_branch
    %1406 = sbr.rel (0) target = $region45
  $region44: #{working_memory_net_forward.1} parent=0 // pred_region
    _
  $region45: #{working_memory_net_forward.1} parent=0 // pred_fallthru
    _

</llo_original>
